<compile_context>
chip_gen: v7x
topology: tpu7x:2x2x1
jax: 0.10.0
libtpu: 0.0.40
codegen_flags: <defaults>
</compile_context>

<pallas_src>
import functools

import jax
import jax.numpy as jnp
from jax.experimental import pallas as pl
from jax.experimental.pallas import tpu as pltpu


def _round_down(x, m):
    return max(m, (x // m) * m)


def _tpu_generation_info():
    """Returns (multi_tensorcore, big_vmem, vmem_byte_cap) for device 0."""
    kind = ""
    try:
        kind = jax.devices()[0].device_kind.lower()
    except Exception:  # no devices / odd backend: fall back to conservative defaults
        pass
    multi_tc = ("v7" in kind) or ("7x" in kind) or ("v4" in kind)  # 2 TCs / megacore
    big_vmem = any(t in kind for t in ("v4", "v5", "v6"))          # 128 MiB VMEM parts
    vmem_cap = (96 << 20) if big_vmem else (48 << 20)              # v7x: 64 MiB physical
    return multi_tc, big_vmem, vmem_cap


def _embed_matmul_kernel(x_ref, w_ref, o_ref, *scratch, k_valid, block_k, mask_last):
    """One (tm, tn) output tile; grid axis 2 reduces over the (masked) vocab dim."""
    acc_ref = scratch[0] if scratch else o_ref   # f32 output -> accumulate in place
    kb = pl.program_id(2)
    nk = pl.num_programs(2)

    @pl.when(kb == 0)
    def _():
        acc_ref[...] = jnp.zeros_like(acc_ref)

    def _accum(x, w):
        acc_ref[...] += jnp.dot(x.astype(w.dtype), w, preferred_element_type=jnp.float32)

    if mask_last:
        # Hot path: every k block except the last is dense -> plain MXU dot.
        @pl.when(kb < nk - 1)
        def _():
            _accum(x_ref[...], w_ref[...])

        # Last block only: zero out reduction positions >= k_valid. This covers
        # both the ragged tail of the K axis and the special-char rows at the
        # bottom of word2vecs. Mask BOTH operands (OOB block padding is
        # undefined and 0 * NaN = NaN).
        @pl.when(kb == nk - 1)
        def _():
            base = kb * block_k
            col_ids = base + jax.lax.broadcasted_iota(jnp.int32, (1, block_k), 1)
            row_ids = base + jax.lax.broadcasted_iota(jnp.int32, (block_k, 1), 0)
            x = jnp.where(col_ids < k_valid, x_ref[...], 0)
            w = jnp.where(row_ids < k_valid, w_ref[...], 0)
            _accum(x, w)
    else:
        _accum(x_ref[...], w_ref[...])

    if scratch:  # narrow output dtype: cast once at the end of the reduction
        @pl.when(kb == nk - 1)
        def _():
            o_ref[...] = acc_ref[...].astype(o_ref.dtype)


def embedding_forward(input_, word2vecs, num_spec_chars, *, tm=None, tn=None, tk=None):
    """Pallas equivalent of Embedding.forward.

    input_    : (B, K) float   (K == effective vocab size)
    word2vecs : (V, E) float   (V == K + num_spec_chars), f32 or bf16
    returns   : (B, E) in input_.dtype
    """
    B, K = input_.shape
    V, E = word2vecs.shape
    k_valid = V if num_spec_chars == 0 else V - num_spec_chars
    if k_valid != K:
        raise ValueError(f"vocab mismatch: input has {K} cols, effective vocab is {k_valid}")

    out_dtype = input_.dtype

    # Tiny problems: a single-step pallas_call only adds launch/pipeline overhead
    # and sub-vreg tiles hit awkward layout constraints; XLA's fused dot is fine.
    if K < 128 or E < 128:
        w = word2vecs if num_spec_chars == 0 else word2vecs[:K]
        return jnp.dot(
            input_.astype(w.dtype), w, preferred_element_type=jnp.float32
        ).astype(out_dtype)

    multi_tc, big_vmem, vmem_cap = _tpu_generation_info()

    xb = jnp.dtype(input_.dtype).itemsize
    wb = jnp.dtype(word2vecs.dtype).itemsize
    ob = jnp.dtype(out_dtype).itemsize
    use_scratch = jnp.dtype(out_dtype) != jnp.float32

    # --- tile selection -----------------------------------------------------
    # tm == B (up to a per-generation cap) -> weights stream from HBM exactly
    # ceil(B / tm) times; big-VMEM parts can afford a much larger tm for large B.
    tm_cap = 2048 if big_vmem else 512
    if tm is None:
        tm = B if B <= tm_cap else _round_down(tm_cap, 8)
    else:
        tm = B if tm >= B else _round_down(tm, 8)

    # tn: full-E (maximally lane-dense output, x streamed exactly once) unless E
    # is huge; the VMEM budget clamp below shrinks it if needed.
    if tn is None:
        tn = E if E <= 4096 else 4096
    else:
        tn = E if tn >= E else _round_down(tn, 128)
    # Only on multi-TensorCore parts: keep >= 2 parallel blocks along E when the
    # batch axis offers no parallelism, so both cores get work.
    if multi_tc and pl.cdiv(B, tm) < 2 and pl.cdiv(E, tn) < 2 and E >= 256:
        tn = _round_down(pl.cdiv(E, 2), 128)

    # tk: big reduction tile (multiple of 128 -> lane/sublane friendly) to
    # amortize the ~0.35us fixed per-grid-step overhead.
    if tk is None:
        tk = 2048
    tk = max(128, (min(tk, K) // 128) * 128)

    # --- clamp tiles to the per-generation VMEM budget ------------------------
    def _tile_bytes(tm_, tn_, tk_):
        b = 2 * (tm_ * tk_ * xb) + 2 * (tk_ * tn_ * wb) + 2 * (tm_ * tn_ * ob)
        if use_scratch:
            b += tm_ * tn_ * 4
        return b

    budget = vmem_cap - (4 << 20)
    while _tile_bytes(tm, tn, tk) > budget and tk > 128:
        tk = _round_down(tk // 2, 128)
    while _tile_bytes(tm, tn, tk) > budget and tn > 128:
        tn = _round_down(tn // 2, 128)
    while _tile_bytes(tm, tn, tk) > budget and tm > 8 and tm % 8 == 0:
        tm = _round_down(tm // 2, 8)

    vmem_limit = int(min(max(_tile_bytes(tm, tn, tk) + (4 << 20), 32 << 20), vmem_cap))

    mask_last = (K % tk) != 0   # ragged tail / special-char rows -> mask last k block only
    grid = (pl.cdiv(B, tm), pl.cdiv(E, tn), pl.cdiv(K, tk))

    # Cast x to the (narrower) weight dtype once in the wrapper when x gets
    # re-streamed per j block or B is large; otherwise the per-block in-kernel
    # cast is cheaper than an extra out-of-kernel pass over x.
    if wb < xb and (grid[1] > 1 or B >= 256):
        input_ = input_.astype(word2vecs.dtype)

    kernel = functools.partial(
        _embed_matmul_kernel, k_valid=K, block_k=tk, mask_last=mask_last
    )
    scratch_shapes = [pltpu.VMEM((tm, tn), jnp.float32)] if use_scratch else []

    # TODO(synk): on v7x, sweeping pipeline_mode=pl.Buffered(3) on the weight
    # BlockSpec can hide residual DMA issue latency once tiles are this large.
    return pl.pallas_call(
        kernel,
        out_shape=jax.ShapeDtypeStruct((B, E), out_dtype),
        grid_spec=pltpu.PrefetchScalarGridSpec(
            num_scalar_prefetch=0,
            grid=grid,
            in_specs=[
                pl.BlockSpec((tm, tk), lambda i, j, k: (i, k)),
                # Full (V, E) weights; the k grid only walks the first K rows,
                # so the special-char tail is never materialized or copied.
                pl.BlockSpec((tk, tn), lambda i, j, k: (k, j)),
            ],
            out_specs=pl.BlockSpec((tm, tn), lambda i, j, k: (i, j)),
            scratch_shapes=scratch_shapes,
        ),
        compiler_params=pltpu.CompilerParams(
            dimension_semantics=("parallel", "parallel", "arbitrary"),
            vmem_limit_bytes=vmem_limit,
        ),
    )(input_, word2vecs)


if __name__ == "__main__":
    key = jax.random.PRNGKey(0)
    k_w, k_x = jax.random.split(key)

    # --- Test 1: bf16 weights, special-char rows excluded in-kernel, ragged K ---
    num_spec_chars = 8
    embed_length = 256            # E
    eff_vocab = 600               # K (ragged w.r.t. the k tile -> masked last block)
    vocab = eff_vocab + num_spec_chars
    batch = 8                     # B

    word2vecs = jax.random.uniform(
        k_w, (vocab, embed_length), dtype=jnp.float32
    ).astype(jnp.bfloat16)        # weights stored bf16 once (load-time cast)
    input_ = jax.random.normal(k_x, (batch, eff_vocab), dtype=jnp.float32)

    out = jax.block_until_ready(embedding_forward(input_, word2vecs, num_spec_chars))
    ref = jnp.dot(
        input_.astype(jnp.bfloat16).astype(jnp.float32),
        word2vecs[:eff_vocab].astype(jnp.float32),
    )
    assert out.shape == (batch, embed_length)
    assert jnp.allclose(out, ref, atol=1e-2, rtol=1e-2), "bf16-weight path mismatch"

    # --- Test 2: f32 weights, num_spec_chars == 0, cleanly divisible shapes ---
    k_w2, k_x2 = jax.random.split(k_w)
    V2, E2, B2 = 512, 256, 8
    w2 = jax.random.uniform(k_w2, (V2, E2), dtype=jnp.float32)
    x2 = jax.random.normal(k_x2, (B2, V2), dtype=jnp.float32)
    out2 = jax.block_until_ready(embedding_forward(x2, w2, 0))
    ref2 = jnp.dot(x2, w2)
    assert out2.shape == (B2, E2)
    assert jnp.allclose(out2, ref2, atol=1e-2, rtol=1e-2), "f32 path mismatch"

    # --- Test 3: bf16 input/output (scratch accumulator + epilogue cast path) ---
    k_w3, k_x3 = jax.random.split(k_x)
    spec3, K3, E3, B3 = 4, 384, 128, 16
    w3 = jax.random.uniform(k_w3, (K3 + spec3, E3), dtype=jnp.float32)
    x3 = jax.random.normal(k_x3, (B3, K3), dtype=jnp.float32).astype(jnp.bfloat16)
    out3 = jax.block_until_ready(embedding_forward(x3, w3, spec3))
    ref3 = jnp.dot(x3.astype(jnp.float32), w3[:K3])
    assert out3.shape == (B3, E3)
    assert jnp.allclose(out3.astype(jnp.float32), ref3, atol=1e-1, rtol=2e-2), \
        "bf16-output path mismatch"

    print("KERNEL_OK")
</pallas_src>

<mosaic_0001>
module attributes {stable_mosaic.version = 11 : i64} {
  func.func @_embed_matmul_kernel(%arg0: i32, %arg1: i32, %arg2: i32, %arg3: memref<8x512xf32, #tpu.memory_space<vmem>>, %arg4: memref<512x256xbf16, #tpu.memory_space<vmem>>, %arg5: memref<8x256xf32, #tpu.memory_space<vmem>>) attributes {dimension_semantics = [#tpu.dimension_semantics<parallel>, #tpu.dimension_semantics<parallel>, #tpu.dimension_semantics<arbitrary>], iteration_bounds = array<i64: 1, 1, 2>, scalar_prefetch = 0 : i64, scratch_operands = 0 : i64, tpu.core_type = #tpu.core_type<tc>, window_params = [{transform_indices = @transform_0, window_bounds = array<i64: 8, 512>}, {transform_indices = @transform_1, window_bounds = array<i64: 512, 256>}, {transform_indices = @transform_2, window_bounds = array<i64: 8, 256>}]} {
    %c0_i32 = arith.constant 0 : i32
    %0 = arith.cmpi eq, %arg2, %c0_i32 : i32
    %1 = arith.extui %0 : i1 to i32
    %c0_i32_0 = arith.constant 0 : i32
    %2 = arith.cmpi ne, %1, %c0_i32_0 : i32
    scf.if %2 {
      %cst = arith.constant 0.000000e+00 : f32
      %9 = vector.broadcast %cst : f32 to vector<8x256xf32>
      %c0 = arith.constant 0 : index
      %c0_4 = arith.constant 0 : index
      %10 = vector.load %arg5[%c0, %c0_4] : memref<8x256xf32, #tpu.memory_space<vmem>>, vector<8x256xf32>
      tpu.vector_store %arg5[%c0, %c0_4], %9 {strides = array<i32>} : memref<8x256xf32, #tpu.memory_space<vmem>>, vector<8x256xf32>,
    } else {
    }
    %c1_i32 = arith.constant 1 : i32
    %3 = arith.cmpi slt, %arg2, %c1_i32 : i32
    %4 = arith.extui %3 : i1 to i32
    %c0_i32_1 = arith.constant 0 : i32
    %5 = arith.cmpi ne, %4, %c0_i32_1 : i32
    scf.if %5 {
      %c0 = arith.constant 0 : index
      %c0_4 = arith.constant 0 : index
      %9 = vector.load %arg3[%c0, %c0_4] : memref<8x512xf32, #tpu.memory_space<vmem>>, vector<8x512xf32>
      %c0_5 = arith.constant 0 : index
      %c0_6 = arith.constant 0 : index
      %10 = vector.load %arg4[%c0_5, %c0_6] : memref<512x256xbf16, #tpu.memory_space<vmem>>, vector<512x256xbf16>
      %c0_7 = arith.constant 0 : index
      %c0_8 = arith.constant 0 : index
      %11 = vector.load %arg5[%c0_7, %c0_8] : memref<8x256xf32, #tpu.memory_space<vmem>>, vector<8x256xf32>
      %12 = arith.truncf %9 : vector<8x512xf32> to vector<8x512xbf16>
      %cst = arith.constant dense<0.000000e+00> : vector<8x256xf32>
      %13 = tpu.matmul %12, %10, %cst {dimension_numbers = #tpu.dot_dimension_numbers<[1], [0], [0], [1], [0, 0, 1, 1], [], []>} : vector<8x512xbf16>, vector<512x256xbf16>, vector<8x256xf32> -> vector<8x256xf32>
      %14 = arith.addf %11, %13 : vector<8x256xf32>
      %c0_9 = arith.constant 0 : index
      %c0_10 = arith.constant 0 : index
      %15 = vector.load %arg5[%c0_9, %c0_10] : memref<8x256xf32, #tpu.memory_space<vmem>>, vector<8x256xf32>
      tpu.vector_store %arg5[%c0_9, %c0_10], %14 {strides = array<i32>} : memref<8x256xf32, #tpu.memory_space<vmem>>, vector<8x256xf32>,
    } else {
    }
    %c1_i32_2 = arith.constant 1 : i32
    %6 = arith.cmpi eq, %arg2, %c1_i32_2 : i32
    %7 = arith.extui %6 : i1 to i32
    %c0_i32_3 = arith.constant 0 : i32
    %8 = arith.cmpi ne, %7, %c0_i32_3 : i32
    scf.if %8 {
      %c512_i32 = arith.constant 512 : i32
      %9 = arith.muli %arg2, %c512_i32 : i32
      %10 = tpu.iota {dimensions = array<i32: 1>} : vector<1x512xi32>
      %11 = vector.broadcast %9 : i32 to vector<1x512xi32>
      %12 = arith.addi %11, %10 : vector<1x512xi32>
      %13 = tpu.iota {dimensions = array<i32: 0>} : vector<512x1xi32>
      %14 = vector.broadcast %9 : i32 to vector<512x1xi32>
      %15 = arith.addi %14, %13 : vector<512x1xi32>
      %c600_i32 = arith.constant 600 : i32
      %16 = vector.broadcast %c600_i32 : i32 to vector<1x512xi32>
      %17 = arith.cmpi slt, %12, %16 : vector<1x512xi32>
      %c0 = arith.constant 0 : index
      %c0_4 = arith.constant 0 : index
      %18 = vector.load %arg3[%c0, %c0_4] : memref<8x512xf32, #tpu.memory_space<vmem>>, vector<8x512xf32>
      %c0_i32_5 = arith.constant 0 : i32
      %19 = arith.sitofp %c0_i32_5 : i32 to f32
      %20 = vector.shape_cast %17 : vector<1x512xi1> to vector<1x512xi1>
      %21 = vector.broadcast %20 : vector<1x512xi1> to vector<8x512xi1>
      %22 = vector.broadcast %19 : f32 to vector<8x512xf32>
      %23 = arith.select %21, %18, %22 : vector<8x512xi1>, vector<8x512xf32>
      %c600_i32_6 = arith.constant 600 : i32
      %24 = vector.broadcast %c600_i32_6 : i32 to vector<512x1xi32>
      %25 = arith.cmpi slt, %15, %24 : vector<512x1xi32>
      %c0_7 = arith.constant 0 : index
      %c0_8 = arith.constant 0 : index
      %26 = vector.load %arg4[%c0_7, %c0_8] : memref<512x256xbf16, #tpu.memory_space<vmem>>, vector<512x256xbf16>
      %c0_i32_9 = arith.constant 0 : i32
      %27 = arith.sitofp %c0_i32_9 : i32 to bf16
      %28 = vector.shape_cast %25 : vector<512x1xi1> to vector<512x1xi1>
      %29 = vector.broadcast %28 : vector<512x1xi1> to vector<512x256xi1>
      %30 = vector.broadcast %27 : bf16 to vector<512x256xbf16>
      %31 = arith.select %29, %26, %30 : vector<512x256xi1>, vector<512x256xbf16>
      %c0_10 = arith.constant 0 : index
      %c0_11 = arith.constant 0 : index
      %32 = vector.load %arg5[%c0_10, %c0_11] : memref<8x256xf32, #tpu.memory_space<vmem>>, vector<8x256xf32>
      %33 = arith.truncf %23 : vector<8x512xf32> to vector<8x512xbf16>
      %cst = arith.constant dense<0.000000e+00> : vector<8x256xf32>
      %34 = tpu.matmul %33, %31, %cst {dimension_numbers = #tpu.dot_dimension_numbers<[1], [0], [0], [1], [0, 0, 1, 1], [], []>} : vector<8x512xbf16>, vector<512x256xbf16>, vector<8x256xf32> -> vector<8x256xf32>
      %35 = arith.addf %32, %34 : vector<8x256xf32>
      %c0_12 = arith.constant 0 : index
      %c0_13 = arith.constant 0 : index
      %36 = vector.load %arg5[%c0_12, %c0_13] : memref<8x256xf32, #tpu.memory_space<vmem>>, vector<8x256xf32>
      tpu.vector_store %arg5[%c0_12, %c0_13], %35 {strides = array<i32>} : memref<8x256xf32, #tpu.memory_space<vmem>>, vector<8x256xf32>,
    } else {
    }
    return
  }
  func.func @transform_0(%arg0: i32, %arg1: i32, %arg2: i32) -> (i32, i32) {
    %c0_i32 = arith.constant 0 : i32
    return %arg0, %arg2 : i32, i32
  }
  func.func @transform_1(%arg0: i32, %arg1: i32, %arg2: i32) -> (i32, i32) {
    %c0_i32 = arith.constant 0 : i32
    return %arg2, %arg1 : i32, i32
  }
  func.func @transform_2(%arg0: i32, %arg1: i32, %arg2: i32) -> (i32, i32) {
    %c0_i32 = arith.constant 0 : i32
    return %arg0, %arg1 : i32, i32
  }
}

</mosaic_0001>

<llo_original>
// kernel: tpu_custom_call.1
$region0: #{tpu_custom_call.1}
  #allocation0 [shape = 'u32[]', space=smem, size = 0x4, offset = 0x4, fixed_abs, tag = 'smem constant byte address 0x4 - core index']
  #allocation1 [shape = 'u32[144,128]{1,0:T(1,128)}', space=vmem, size = 0x12000, scoped, tag = 'internal scratch']
  %s0 = inlined_call_operand.hbm [shape: f32[8,600], index: 0, kind: input, shape index: {}]
  %s1 = inlined_call_operand.hbm [shape: bf16[608,256], index: 1, kind: input, shape index: {}]
  %s2 = inlined_call_operand.hbm [shape: f32[8,256], index: 2, kind: output, shape index: {}]
  %s3 = sld [smem:[#allocation0]]
  $region61: #{tpu_custom_call.1} parent=0
    _
  %s5 = ssub.s32 1, %s3
  %s6 = scalar_select 0, %s5, %s3
  $region1: #{tpu_custom_call.1} parent=0
    #allocation2 [shape = 'u8[32768]{0}', space=vmem, size = 0x8000, scoped, tag = 'input window, operand 0']
    #allocation3 [shape = 's32[2]{0}', space=sflag, size = 0x8, scoped, tag = 'scoped memory for tpu_custom_call.1']
    #allocation4 [shape = 's32[2]{0}', space=sflag, size = 0x8, scoped, tag = 'scoped memory for tpu_custom_call.1']
    #allocation5 [shape = 'u8[524288]{0}', space=vmem, size = 0x80000, scoped, tag = 'input window, operand 1']
    #allocation6 [shape = 's32[2]{0}', space=sflag, size = 0x8, scoped, tag = 'scoped memory for tpu_custom_call.1']
    #allocation7 [shape = 'u8[8192]{0}', space=vmem, size = 0x2000, scoped, tag = 'output window, operand 0, single buffered']
    %7 = vsyncpa [#allocation3], 0
    %s8 = scalar_lea.sflag [#allocation3], 1
    %9 = vsyncpa %s8, 0
    %10 = vsyncpa [#allocation6], 0
    %s11 = scalar_lea.sflag [#allocation6], 1
    %12 = vsyncpa %s11, 0
    %13 = vsyncpa [#allocation4], 0
    loop: start=0, step=1, limit=4
    $region2: #{tpu_custom_call.1} parent=1 // loop_pre_header
      _
    $region3: #{tpu_custom_call.1} parent=1 // loop_header
      %s15 = sphi 0, %s19
      %p16 = scmp.ge.s32.totalorder %s15, 4
      %s22 = sphi 0, %s41
      %s23 = sphi 0, %s37
      %s24 = sphi 0, %s33
      %s25 = sphi 0, %s22
      %s26 = sphi 0, %s23
      %s27 = sphi 0, %s24
      %s28 = sphi 0, %s25
      %s29 = sphi 0, %s26
      %s30 = sphi 0, %s27
      %s46 = sphi 0, %s48
      %s49 = sphi 0, %s46
      %s50 = sphi 0, %s49
      %s66 = sphi 0, %s50
      %s74 = sphi 0, %s76
      %s77 = sphi 0, %s74
      %s78 = sphi 0, %s77
      %s94 = sphi 0, %s78
      %s102 = sphi 0, %s104
      %s105 = sphi 0, %s102
      %s106 = sphi 0, %s105
      %s122 = sphi 0, %s106
    $region4: #{tpu_custom_call.1} parent=1 // loop_header_branch
      %18 = sbr.rel (%p16) target = $region8
    $region5: #{tpu_custom_call.1} parent=1 // loop_body
      %s20 = ssub.s32 %s15, 1
      %s21 = ssub.s32 %s15, 2
      %s31 = sadd.s32 1, %s24
      %p32 = scmp.ge.s32.totalorder %s31, 2
      %s33 = scalar_select %p32, 0, %s31
      %s34 = sadd.s32 1, %s23
      %s35 = scalar_select %p32, %s34, %s23
      %p36 = scmp.ge.s32.totalorder %s35, 1
      %s37 = scalar_select %p36, 0, %s35
      %s38 = sadd.s32 1, %s22
      %s39 = scalar_select %p36, %s38, %s22
      %p40 = scmp.ge.s32.totalorder %s39, 1
      %s41 = scalar_select %p40, 0, %s39
      %s42 = ssub.s32 %s22, %s41
      %s43 = ssub.s32 %s24, %s33
      %s44 = sor.u32 %s42, %s43
      %p45 = scmp.eq.s32.totalorder %s44, 0
      %s47 = sadd.s32 %s46, 1
      %s48 = scalar_select %p45, %s46, %s47
      %p51 = pneg %p45
      %p52 = scmp.eq.s32.totalorder %s15, 1
      %p53 = por %p51, %p52
      %p54 = scmp.ne.s32.totalorder %s46, %s49
      %p55 = scmp.eq.s32.totalorder %s15, 0
      %p56 = por %p54, %p55
      %p57 = scmp.ne.s32.totalorder %s46, %s49
      %p58 = scmp.eq.s32.totalorder %s20, 1
      %p59 = por %p57, %p58
      %p60 = scmp.ne.s32.totalorder %s49, %s50
      %p61 = scmp.eq.s32.totalorder %s20, 0
      %p62 = por %p60, %p61
      %p63 = scmp.ne.s32.totalorder %s49, %s50
      %p64 = scmp.eq.s32.totalorder %s21, 1
      %p65 = por %p63, %p64
      %p67 = scmp.ne.s32.totalorder %s50, %s66
      %p68 = scmp.eq.s32.totalorder %s21, 0
      %p69 = por %p67, %p68
      %s70 = ssub.s32 %s24, %s33
      %s71 = ssub.s32 %s23, %s37
      %s72 = sor.u32 %s70, %s71
      %p73 = scmp.eq.s32.totalorder %s72, 0
      %s75 = sadd.s32 %s74, 1
      %s76 = scalar_select %p73, %s74, %s75
      %p79 = pneg %p73
      %p80 = scmp.eq.s32.totalorder %s15, 1
      %p81 = por %p79, %p80
      %p82 = scmp.ne.s32.totalorder %s74, %s77
      %p83 = scmp.eq.s32.totalorder %s15, 0
      %p84 = por %p82, %p83
      %p85 = scmp.ne.s32.totalorder %s74, %s77
      %p86 = scmp.eq.s32.totalorder %s20, 1
      %p87 = por %p85, %p86
      %p88 = scmp.ne.s32.totalorder %s77, %s78
      %p89 = scmp.eq.s32.totalorder %s20, 0
      %p90 = por %p88, %p89
      %p91 = scmp.ne.s32.totalorder %s77, %s78
      %p92 = scmp.eq.s32.totalorder %s21, 1
      %p93 = por %p91, %p92
      %p95 = scmp.ne.s32.totalorder %s78, %s94
      %p96 = scmp.eq.s32.totalorder %s21, 0
      %p97 = por %p95, %p96
      %s98 = ssub.s32 %s22, %s41
      %s99 = ssub.s32 %s23, %s37
      %s100 = sor.u32 %s98, %s99
      %p101 = scmp.eq.s32.totalorder %s100, 0
      %s103 = sadd.s32 %s102, 1
      %s104 = scalar_select %p101, %s102, %s103
      %p107 = pneg %p101
      %p108 = scmp.eq.s32.totalorder %s15, 1
      %p109 = por %p107, %p108
      %p110 = scmp.ne.s32.totalorder %s102, %s105
      %p111 = scmp.eq.s32.totalorder %s15, 0
      %p112 = por %p110, %p111
      %p113 = scmp.ne.s32.totalorder %s102, %s105
      %p114 = scmp.eq.s32.totalorder %s20, 1
      %p115 = por %p113, %p114
      %p116 = scmp.ne.s32.totalorder %s105, %s106
      %p117 = scmp.eq.s32.totalorder %s20, 0
      %p118 = por %p116, %p117
      %p119 = scmp.ne.s32.totalorder %s105, %s106
      %p120 = scmp.eq.s32.totalorder %s21, 1
      %p121 = por %p119, %p120
      %p123 = scmp.ne.s32.totalorder %s106, %s122
      %p124 = scmp.eq.s32.totalorder %s21, 0
      %p125 = por %p123, %p124
      %p126 = scmp.le.s32.totalorder 1, %s15
      %p127 = scmp.lt.s32.totalorder %s15, 3
      %p128 = pnand %p126, %p127
      %p129 = pneg %p128
      // Predicated region
      $region9: #{tpu_custom_call.1} parent=5 // pred_check
        _
      $region10: #{tpu_custom_call.1} parent=5 // pred_check_branch
        %131 = sbr.rel (%p128) target = $region12
      $region11: #{tpu_custom_call.1} parent=5 // pred_region
        %s132 = ssub.s32 %s15, 1
      $region12: #{tpu_custom_call.1} parent=5 // pred_fallthru
        _
      %p133 = scmp.lt.s32.totalorder %s15, 2
      // Predicated region
      $region13: #{tpu_custom_call.1} parent=5 // pred_check
        %p134 = pneg %p133
      $region14: #{tpu_custom_call.1} parent=5 // pred_check_branch
        %136 = sbr.rel (%p134) target = $region16
      $region15: #{tpu_custom_call.1} parent=5 // pred_region
        // Predicated region
        $region17: #{tpu_custom_call.1} parent=15 // pred_check
          %p137 = pneg %p56
        $region18: #{tpu_custom_call.1} parent=15 // pred_check_branch
          %139 = sbr.rel (%p137) target = $region20
        $region19: #{tpu_custom_call.1} parent=15 // pred_region
          %s140 = sand.u32 %s46, 1
          %s141 = scalar_lea.sflag [#allocation3], %s140
          %s142 = sand.u32 %s46, 1
          %s143 = smul.addr %s142, 32
          %s144 = scalar_lea.vmem [#allocation2], %s143
          %s145 = smul.u32 4, %s24
          %s146 = ssub.s32 5, %s145
          %p147 = scmp.lt.s32.totalorder %s146, 4
          %s148 = scalar_select %p147, %s146, 4
          %s149 = smul.u32 128, %s148
          %s151 = ssub.s32 512, %s149
          %152 = vsyncadd %s141, %s151
          %p153 = scmp.ne.s32.totalorder 0, %s149
          %s154 = smul.addr %s22, 5
          %s155 = sadd.s32 %s145, %s154
          %s156 = smul.addr %s155, 128
          %s157 = scalar_lea.hbm %s0, %s156
          %s158 = smul.u32 %s148, 8
          %s159 = sshll.u32 %s158, 4
          %s160 = sshll.u32 %s144, 4
          %s161 = int_to_ptr.vmem [resolvable:$true] %s160
          %163 = dma.hbm_to_vmem [thread:$0]  (%p153), %s157, %s159, %s161, %s141
        $region20: #{tpu_custom_call.1} parent=15 // pred_fallthru
          _
        // Predicated region
        $region21: #{tpu_custom_call.1} parent=15 // pred_check
          %p164 = pneg %p84
        $region22: #{tpu_custom_call.1} parent=15 // pred_check_branch
          %166 = sbr.rel (%p164) target = $region24
        $region23: #{tpu_custom_call.1} parent=15 // pred_region
          %s167 = sand.u32 %s74, 1
          %s168 = scalar_lea.sflag [#allocation6], %s167
          %s169 = sand.u32 %s74, 1
          %s170 = smul.addr %s169, 512
          %s171 = scalar_lea.vmem [#allocation5], %s170
          %s172 = smul.u32 64, %s24
          %s173 = smul.u32 2, %s23
          %s174 = ssub.s32 76, %s172
          %p175 = scmp.lt.s32.totalorder %s174, 64
          %s176 = scalar_select %p175, %s174, 64
          %s177 = smul.u32 64, %s176
          %s178 = smul.u32 %s177, 2
          %s180 = ssub.s32 8192, %s178
          %181 = vsyncadd %s168, %s180
          %p182 = scmp.ne.s32.totalorder 0, %s178
          %s183 = smul.addr %s172, 2
          %s184 = sadd.s32 %s173, %s183
          %s185 = smul.addr %s184, 64
          %s186 = scalar_lea.hbm %s1, %s185
          %s187 = smul.u32 8, %s176
          %s188 = sshll.u32 %s171, 4
          %s189 = int_to_ptr.vmem [resolvable:$true] %s188
          %s190 = sshll.u32 %s187, 4
          %194 = dma.hbm_to_vmem [thread:$0]  (%p182), %s186, %s190, %s189, %s168, 128, 128, 8
        $region24: #{tpu_custom_call.1} parent=15 // pred_fallthru
          _
      $region16: #{tpu_custom_call.1} parent=5 // pred_fallthru
        _
      %p195 = scmp.le.s32.totalorder 1, %s15
      %p196 = scmp.lt.s32.totalorder %s15, 3
      %p197 = pnand %p195, %p196
      %p198 = pneg %p197
      // Predicated region
      $region25: #{tpu_custom_call.1} parent=5 // pred_check
        _
      $region26: #{tpu_custom_call.1} parent=5 // pred_check_branch
        %200 = sbr.rel (%p197) target = $region28
      $region27: #{tpu_custom_call.1} parent=5 // pred_region
        %s201 = ssub.s32 %s15, 1
        %s202 = sand.u32 %s49, 1
        %s203 = scalar_lea.sflag [#allocation3], %s202
        %s204 = sand.u32 %s49, 1
        %s205 = smul.addr %s204, 32
        %s206 = scalar_lea.vmem [#allocation2], %s205
        // Predicated region
        $region29: #{tpu_custom_call.1} parent=27 // pred_check
          %p207 = pneg %p62
        $region30: #{tpu_custom_call.1} parent=27 // pred_check_branch
          %209 = sbr.rel (%p207) target = $region32
        $region31: #{tpu_custom_call.1} parent=27 // pred_region
          %210 = dma.done %s203, 512
        $region32: #{tpu_custom_call.1} parent=27 // pred_fallthru
          _
        %s211 = sand.u32 %s77, 1
        %s212 = scalar_lea.sflag [#allocation6], %s211
        %s213 = sand.u32 %s77, 1
        %s214 = smul.addr %s213, 512
        %s215 = scalar_lea.vmem [#allocation5], %s214
        // Predicated region
        $region33: #{tpu_custom_call.1} parent=27 // pred_check
          %p216 = pneg %p90
        $region34: #{tpu_custom_call.1} parent=27 // pred_check_branch
          %218 = sbr.rel (%p216) target = $region36
        $region35: #{tpu_custom_call.1} parent=27 // pred_region
          %219 = dma.done %s212, 8192
        $region36: #{tpu_custom_call.1} parent=27 // pred_fallthru
          _
        %s220 = sand.u32 %s49, 1
        %s221 = scalar_lea.sflag [#allocation3], %s220
        %s222 = sand.u32 %s49, 1
        %s223 = smul.addr %s222, 32
        %s224 = scalar_lea.vmem [#allocation2], %s223
        %p225 = pneg %p62
        %p226 = pneg %p59
        %s227 = sand.u32 %s77, 1
        %s228 = scalar_lea.sflag [#allocation6], %s227
        %s229 = sand.u32 %s77, 1
        %s230 = smul.addr %s229, 512
        %s231 = scalar_lea.vmem [#allocation5], %s230
        %p232 = pneg %p90
        %p233 = pneg %p87
        %p234 = pneg %p118
        %p235 = pneg %p115
        %s236 = smul.u32 4, %s27
        %s237 = ssub.s32 5, %s236
        %p238 = scmp.lt.s32.totalorder %s237, 4
        %s239 = scalar_select %p238, %s237, 4
        %s240 = smul.u32 128, %s239
        %s241 = smul.u32 64, %s27
        %s242 = smul.u32 2, %s26
        %s243 = ssub.s32 76, %s241
        %p244 = scmp.lt.s32.totalorder %s243, 64
        %s245 = scalar_select %p244, %s243, 64
        %s246 = smul.u32 64, %s245
        %s247 = smul.u32 %s246, 2
        %s248 = smul.u32 2, %s26
        %p250 = scmp.eq.s32.totalorder %s27, 0
        // Predicated region
        $region37: #{tpu_custom_call.1} parent=27 // pred_check
          %p251 = pneg %p250
        $region38: #{tpu_custom_call.1} parent=27 // pred_check_branch
          %253 = sbr.rel (%p251) target = $region40
        $region39: #{tpu_custom_call.1} parent=27 // pred_region
          %254 = vst [vmem:[#allocation7] sm:$0xff] 0.0
          %255 = vst [vmem:[#allocation7 + $0x8] sm:$0xff] 0.0
        $region40: #{tpu_custom_call.1} parent=27 // pred_fallthru
          _
        %p256 = scmp.lt.s32.totalorder %s27, 1
        // Predicated region
        $region41: #{tpu_custom_call.1} parent=27 // pred_check
          %p257 = pneg %p256
        $region42: #{tpu_custom_call.1} parent=27 // pred_check_branch
          %259 = sbr.rel (%p257) target = $region44
        $region43: #{tpu_custom_call.1} parent=27 // pred_region
          %v260 = vld [vmem:[%s206] sm:$0xff]
          %v261 = vld [vmem:[%s206 + $0x8] sm:$0xff]
          %v262 = vld [vmem:[%s206 + $0x10] sm:$0xff]
          %v263 = vld [vmem:[%s206 + $0x18] sm:$0xff]
          %v264 = vld [vmem:[%s215] sm:$0xff]
          %v265 = vld [vmem:[%s215 + $0x8] sm:$0xff]
          %v266 = vld [vmem:[%s215 + $0x10] sm:$0xff]
          %v267 = vld [vmem:[%s215 + $0x18] sm:$0xff]
          %v268 = vld [vmem:[%s215 + $0x20] sm:$0xff]
          %v269 = vld [vmem:[%s215 + $0x28] sm:$0xff]
          %v270 = vld [vmem:[%s215 + $0x30] sm:$0xff]
          %v271 = vld [vmem:[%s215 + $0x38] sm:$0xff]
          %v272 = vld [vmem:[%s215 + $0x40] sm:$0xff]
          %v273 = vld [vmem:[%s215 + $0x48] sm:$0xff]
          %v274 = vld [vmem:[%s215 + $0x50] sm:$0xff]
          %v275 = vld [vmem:[%s215 + $0x58] sm:$0xff]
          %v276 = vld [vmem:[%s215 + $0x60] sm:$0xff]
          %v277 = vld [vmem:[%s215 + $0x68] sm:$0xff]
          %v278 = vld [vmem:[%s215 + $0x70] sm:$0xff]
          %v279 = vld [vmem:[%s215 + $0x78] sm:$0xff]
          %v280 = vld [vmem:[%s215 + $0x80] sm:$0xff]
          %v281 = vld [vmem:[%s215 + $0x88] sm:$0xff]
          %v282 = vld [vmem:[%s215 + $0x90] sm:$0xff]
          %v283 = vld [vmem:[%s215 + $0x98] sm:$0xff]
          %v284 = vld [vmem:[%s215 + $0xa0] sm:$0xff]
          %v285 = vld [vmem:[%s215 + $0xa8] sm:$0xff]
          %v286 = vld [vmem:[%s215 + $0xb0] sm:$0xff]
          %v287 = vld [vmem:[%s215 + $0xb8] sm:$0xff]
          %v288 = vld [vmem:[%s215 + $0xc0] sm:$0xff]
          %v289 = vld [vmem:[%s215 + $0xc8] sm:$0xff]
          %v290 = vld [vmem:[%s215 + $0xd0] sm:$0xff]
          %v291 = vld [vmem:[%s215 + $0xd8] sm:$0xff]
          %v292 = vld [vmem:[%s215 + $0xe0] sm:$0xff]
          %v293 = vld [vmem:[%s215 + $0xe8] sm:$0xff]
          %v294 = vld [vmem:[%s215 + $0xf0] sm:$0xff]
          %v295 = vld [vmem:[%s215 + $0xf8] sm:$0xff]
          %v296 = vld [vmem:[%s215 + $0x100] sm:$0xff]
          %v297 = vld [vmem:[%s215 + $0x108] sm:$0xff]
          %v298 = vld [vmem:[%s215 + $0x110] sm:$0xff]
          %v299 = vld [vmem:[%s215 + $0x118] sm:$0xff]
          %v300 = vld [vmem:[%s215 + $0x120] sm:$0xff]
          %v301 = vld [vmem:[%s215 + $0x128] sm:$0xff]
          %v302 = vld [vmem:[%s215 + $0x130] sm:$0xff]
          %v303 = vld [vmem:[%s215 + $0x138] sm:$0xff]
          %v304 = vld [vmem:[%s215 + $0x140] sm:$0xff]
          %v305 = vld [vmem:[%s215 + $0x148] sm:$0xff]
          %v306 = vld [vmem:[%s215 + $0x150] sm:$0xff]
          %v307 = vld [vmem:[%s215 + $0x158] sm:$0xff]
          %v308 = vld [vmem:[%s215 + $0x160] sm:$0xff]
          %v309 = vld [vmem:[%s215 + $0x168] sm:$0xff]
          %v310 = vld [vmem:[%s215 + $0x170] sm:$0xff]
          %v311 = vld [vmem:[%s215 + $0x178] sm:$0xff]
          %v312 = vld [vmem:[%s215 + $0x180] sm:$0xff]
          %v313 = vld [vmem:[%s215 + $0x188] sm:$0xff]
          %v314 = vld [vmem:[%s215 + $0x190] sm:$0xff]
          %v315 = vld [vmem:[%s215 + $0x198] sm:$0xff]
          %v316 = vld [vmem:[%s215 + $0x1a0] sm:$0xff]
          %v317 = vld [vmem:[%s215 + $0x1a8] sm:$0xff]
          %v318 = vld [vmem:[%s215 + $0x1b0] sm:$0xff]
          %v319 = vld [vmem:[%s215 + $0x1b8] sm:$0xff]
          %v320 = vld [vmem:[%s215 + $0x1c0] sm:$0xff]
          %v321 = vld [vmem:[%s215 + $0x1c8] sm:$0xff]
          %v322 = vld [vmem:[%s215 + $0x1d0] sm:$0xff]
          %v323 = vld [vmem:[%s215 + $0x1d8] sm:$0xff]
          %v324 = vld [vmem:[%s215 + $0x1e0] sm:$0xff]
          %v325 = vld [vmem:[%s215 + $0x1e8] sm:$0xff]
          %v326 = vld [vmem:[%s215 + $0x1f0] sm:$0xff]
          %v327 = vld [vmem:[%s215 + $0x1f8] sm:$0xff]
          %v328 = vld [vmem:[#allocation7] sm:$0xff]
          %v329 = vld [vmem:[#allocation7 + $0x8] sm:$0xff]
          %v330 = vpack.c.bf16 %v260, %v260
          %v331 = vpack.c.bf16 %v261, %v261
          %v332 = vpack.c.bf16 %v262, %v262
          %v333 = vpack.c.bf16 %v263, %v263
          %v398 = vunpack.c.l.b16 %v264
          %v399 = vunpack.c.h.b16 %v264
          %v400 = vunpack.c.l.b16 %v265
          %v401 = vunpack.c.h.b16 %v265
          %v402 = vunpack.c.l.b16 %v266
          %v403 = vunpack.c.h.b16 %v266
          %v404 = vunpack.c.l.b16 %v267
          %v405 = vunpack.c.h.b16 %v267
          %v406 = vunpack.c.l.b16 %v268
          %v407 = vunpack.c.h.b16 %v268
          %v408 = vunpack.c.l.b16 %v269
          %v409 = vunpack.c.h.b16 %v269
          %v410 = vunpack.c.l.b16 %v270
          %v411 = vunpack.c.h.b16 %v270
          %v412 = vunpack.c.l.b16 %v271
          %v413 = vunpack.c.h.b16 %v271
          %v414 = vunpack.c.l.b16 %v272
          %v415 = vunpack.c.h.b16 %v272
          %v416 = vunpack.c.l.b16 %v273
          %v417 = vunpack.c.h.b16 %v273
          %v418 = vunpack.c.l.b16 %v274
          %v419 = vunpack.c.h.b16 %v274
          %v420 = vunpack.c.l.b16 %v275
          %v421 = vunpack.c.h.b16 %v275
          %v422 = vunpack.c.l.b16 %v276
          %v423 = vunpack.c.h.b16 %v276
          %v424 = vunpack.c.l.b16 %v277
          %v425 = vunpack.c.h.b16 %v277
          %v426 = vunpack.c.l.b16 %v278
          %v427 = vunpack.c.h.b16 %v278
          %v428 = vunpack.c.l.b16 %v279
          %v429 = vunpack.c.h.b16 %v279
          %v430 = vunpack.c.l.b16 %v280
          %v431 = vunpack.c.h.b16 %v280
          %v432 = vunpack.c.l.b16 %v281
          %v433 = vunpack.c.h.b16 %v281
          %v434 = vunpack.c.l.b16 %v282
          %v435 = vunpack.c.h.b16 %v282
          %v436 = vunpack.c.l.b16 %v283
          %v437 = vunpack.c.h.b16 %v283
          %v438 = vunpack.c.l.b16 %v284
          %v439 = vunpack.c.h.b16 %v284
          %v440 = vunpack.c.l.b16 %v285
          %v441 = vunpack.c.h.b16 %v285
          %v442 = vunpack.c.l.b16 %v286
          %v443 = vunpack.c.h.b16 %v286
          %v444 = vunpack.c.l.b16 %v287
          %v445 = vunpack.c.h.b16 %v287
          %v446 = vunpack.c.l.b16 %v288
          %v447 = vunpack.c.h.b16 %v288
          %v448 = vunpack.c.l.b16 %v289
          %v449 = vunpack.c.h.b16 %v289
          %v450 = vunpack.c.l.b16 %v290
          %v451 = vunpack.c.h.b16 %v290
          %v452 = vunpack.c.l.b16 %v291
          %v453 = vunpack.c.h.b16 %v291
          %v454 = vunpack.c.l.b16 %v292
          %v455 = vunpack.c.h.b16 %v292
          %v456 = vunpack.c.l.b16 %v293
          %v457 = vunpack.c.h.b16 %v293
          %v458 = vunpack.c.l.b16 %v294
          %v459 = vunpack.c.h.b16 %v294
          %v460 = vunpack.c.l.b16 %v295
          %v461 = vunpack.c.h.b16 %v295
          %v462 = vunpack.c.l.b16 %v296
          %v463 = vunpack.c.h.b16 %v296
          %v464 = vunpack.c.l.b16 %v297
          %v465 = vunpack.c.h.b16 %v297
          %v466 = vunpack.c.l.b16 %v298
          %v467 = vunpack.c.h.b16 %v298
          %v468 = vunpack.c.l.b16 %v299
          %v469 = vunpack.c.h.b16 %v299
          %v470 = vunpack.c.l.b16 %v300
          %v471 = vunpack.c.h.b16 %v300
          %v472 = vunpack.c.l.b16 %v301
          %v473 = vunpack.c.h.b16 %v301
          %v474 = vunpack.c.l.b16 %v302
          %v475 = vunpack.c.h.b16 %v302
          %v476 = vunpack.c.l.b16 %v303
          %v477 = vunpack.c.h.b16 %v303
          %v478 = vunpack.c.l.b16 %v304
          %v479 = vunpack.c.h.b16 %v304
          %v480 = vunpack.c.l.b16 %v305
          %v481 = vunpack.c.h.b16 %v305
          %v482 = vunpack.c.l.b16 %v306
          %v483 = vunpack.c.h.b16 %v306
          %v484 = vunpack.c.l.b16 %v307
          %v485 = vunpack.c.h.b16 %v307
          %v486 = vunpack.c.l.b16 %v308
          %v487 = vunpack.c.h.b16 %v308
          %v488 = vunpack.c.l.b16 %v309
          %v489 = vunpack.c.h.b16 %v309
          %v490 = vunpack.c.l.b16 %v310
          %v491 = vunpack.c.h.b16 %v310
          %v492 = vunpack.c.l.b16 %v311
          %v493 = vunpack.c.h.b16 %v311
          %v494 = vunpack.c.l.b16 %v312
          %v495 = vunpack.c.h.b16 %v312
          %v496 = vunpack.c.l.b16 %v313
          %v497 = vunpack.c.h.b16 %v313
          %v498 = vunpack.c.l.b16 %v314
          %v499 = vunpack.c.h.b16 %v314
          %v500 = vunpack.c.l.b16 %v315
          %v501 = vunpack.c.h.b16 %v315
          %v502 = vunpack.c.l.b16 %v316
          %v503 = vunpack.c.h.b16 %v316
          %v504 = vunpack.c.l.b16 %v317
          %v505 = vunpack.c.h.b16 %v317
          %v506 = vunpack.c.l.b16 %v318
          %v507 = vunpack.c.h.b16 %v318
          %v508 = vunpack.c.l.b16 %v319
          %v509 = vunpack.c.h.b16 %v319
          %v510 = vunpack.c.l.b16 %v320
          %v511 = vunpack.c.h.b16 %v320
          %v512 = vunpack.c.l.b16 %v321
          %v513 = vunpack.c.h.b16 %v321
          %v514 = vunpack.c.l.b16 %v322
          %v515 = vunpack.c.h.b16 %v322
          %v516 = vunpack.c.l.b16 %v323
          %v517 = vunpack.c.h.b16 %v323
          %v518 = vunpack.c.l.b16 %v324
          %v519 = vunpack.c.h.b16 %v324
          %v520 = vunpack.c.l.b16 %v325
          %v521 = vunpack.c.h.b16 %v325
          %v522 = vunpack.c.l.b16 %v326
          %v523 = vunpack.c.h.b16 %v326
          %v524 = vunpack.c.l.b16 %v327
          %v525 = vunpack.c.h.b16 %v327
          %v526 = vpack.c.b16 %v400, %v398
          %v527 = vpack.c.b16 %v401, %v399
          %v528 = vpack.c.b16 %v404, %v402
          %v529 = vpack.c.b16 %v405, %v403
          %v530 = vpack.c.b16 %v408, %v406
          %v531 = vpack.c.b16 %v409, %v407
          %v532 = vpack.c.b16 %v412, %v410
          %v533 = vpack.c.b16 %v413, %v411
          %v534 = vpack.c.b16 %v416, %v414
          %v535 = vpack.c.b16 %v417, %v415
          %v536 = vpack.c.b16 %v420, %v418
          %v537 = vpack.c.b16 %v421, %v419
          %v538 = vpack.c.b16 %v424, %v422
          %v539 = vpack.c.b16 %v425, %v423
          %v540 = vpack.c.b16 %v428, %v426
          %v541 = vpack.c.b16 %v429, %v427
          %v542 = vpack.c.b16 %v432, %v430
          %v543 = vpack.c.b16 %v433, %v431
          %v544 = vpack.c.b16 %v436, %v434
          %v545 = vpack.c.b16 %v437, %v435
          %v546 = vpack.c.b16 %v440, %v438
          %v547 = vpack.c.b16 %v441, %v439
          %v548 = vpack.c.b16 %v444, %v442
          %v549 = vpack.c.b16 %v445, %v443
          %v550 = vpack.c.b16 %v448, %v446
          %v551 = vpack.c.b16 %v449, %v447
          %v552 = vpack.c.b16 %v452, %v450
          %v553 = vpack.c.b16 %v453, %v451
          %v554 = vpack.c.b16 %v456, %v454
          %v555 = vpack.c.b16 %v457, %v455
          %v556 = vpack.c.b16 %v460, %v458
          %v557 = vpack.c.b16 %v461, %v459
          %v558 = vpack.c.b16 %v464, %v462
          %v559 = vpack.c.b16 %v465, %v463
          %v560 = vpack.c.b16 %v468, %v466
          %v561 = vpack.c.b16 %v469, %v467
          %v562 = vpack.c.b16 %v472, %v470
          %v563 = vpack.c.b16 %v473, %v471
          %v564 = vpack.c.b16 %v476, %v474
          %v565 = vpack.c.b16 %v477, %v475
          %v566 = vpack.c.b16 %v480, %v478
          %v567 = vpack.c.b16 %v481, %v479
          %v568 = vpack.c.b16 %v484, %v482
          %v569 = vpack.c.b16 %v485, %v483
          %v570 = vpack.c.b16 %v488, %v486
          %v571 = vpack.c.b16 %v489, %v487
          %v572 = vpack.c.b16 %v492, %v490
          %v573 = vpack.c.b16 %v493, %v491
          %v574 = vpack.c.b16 %v496, %v494
          %v575 = vpack.c.b16 %v497, %v495
          %v576 = vpack.c.b16 %v500, %v498
          %v577 = vpack.c.b16 %v501, %v499
          %v578 = vpack.c.b16 %v504, %v502
          %v579 = vpack.c.b16 %v505, %v503
          %v580 = vpack.c.b16 %v508, %v506
          %v581 = vpack.c.b16 %v509, %v507
          %v582 = vpack.c.b16 %v512, %v510
          %v583 = vpack.c.b16 %v513, %v511
          %v584 = vpack.c.b16 %v516, %v514
          %v585 = vpack.c.b16 %v517, %v515
          %v586 = vpack.c.b16 %v520, %v518
          %v587 = vpack.c.b16 %v521, %v519
          %v588 = vpack.c.b16 %v524, %v522
          %v589 = vpack.c.b16 %v525, %v523
          %654 = vmatprep.subr.bf16.mxu0 %v527
          %655 = vmatpush1.bf16.msra.mxu0 %v526
          %656 = vmatprep.subr.bf16.mxu0 %v529
          %657 = vmatpush1.bf16.msra.mxu0 %v528
          %658 = vmatprep.subr.bf16.mxu0 %v531
          %659 = vmatpush1.bf16.msra.mxu0 %v530
          %660 = vmatprep.subr.bf16.mxu0 %v533
          %661 = vmatpush1.bf16.msra.mxu0 %v532
          %662 = vmatprep.subr.bf16.mxu0 %v535
          %663 = vmatpush1.bf16.msra.mxu0 %v534
          %664 = vmatprep.subr.bf16.mxu0 %v537
          %665 = vmatpush1.bf16.msra.mxu0 %v536
          %666 = vmatprep.subr.bf16.mxu0 %v539
          %667 = vmatpush1.bf16.msra.mxu0 %v538
          %668 = vmatprep.subr.bf16.mxu0 %v541
          %669 = vmatpush1.bf16.msra.mxu0 %v540
          %670 = vmatprep.subr.bf16.mxu0 %v543
          %671 = vmatpush1.bf16.msra.mxu0 %v542
          %672 = vmatprep.subr.bf16.mxu0 %v545
          %673 = vmatpush1.bf16.msra.mxu0 %v544
          %674 = vmatprep.subr.bf16.mxu0 %v547
          %675 = vmatpush1.bf16.msra.mxu0 %v546
          %676 = vmatprep.subr.bf16.mxu0 %v549
          %677 = vmatpush1.bf16.msra.mxu0 %v548
          %678 = vmatprep.subr.bf16.mxu0 %v551
          %679 = vmatpush1.bf16.msra.mxu0 %v550
          %680 = vmatprep.subr.bf16.mxu0 %v553
          %681 = vmatpush1.bf16.msra.mxu0 %v552
          %682 = vmatprep.subr.bf16.mxu0 %v555
          %683 = vmatpush1.bf16.msra.mxu0 %v554
          %684 = vmatprep.subr.bf16.mxu0 %v557
          %685 = vmatpush1.bf16.msra.mxu0 %v556
          %686 = vmatprep.mubr.bf16.mxu0 %v331
          %687 = vmatmul.mubr.bf16.gmra.mrb[0].mxu0 %v330
          %v688 = vpop.f32.mrb[0].mxu0
          %v689 = vadd.f32 0.0, %v688
          %v690 = vpop.f32.mrb[0].mxu0
          %v691 = vadd.f32 0.0, %v690
          %v692 = vpop.f32.mrb[0].mxu0
          %v693 = vpop.f32.mrb[0].mxu0
          %694 = vdwg.mxu0
          %695 = vmatprep.subr.bf16.mxu0 %v559
          %696 = vmatpush1.bf16.msra.mxu0 %v558
          %697 = vmatprep.subr.bf16.mxu0 %v561
          %698 = vmatpush1.bf16.msra.mxu0 %v560
          %699 = vmatprep.subr.bf16.mxu0 %v563
          %700 = vmatpush1.bf16.msra.mxu0 %v562
          %701 = vmatprep.subr.bf16.mxu0 %v565
          %702 = vmatpush1.bf16.msra.mxu0 %v564
          %703 = vmatprep.subr.bf16.mxu0 %v567
          %704 = vmatpush1.bf16.msra.mxu0 %v566
          %705 = vmatprep.subr.bf16.mxu0 %v569
          %706 = vmatpush1.bf16.msra.mxu0 %v568
          %707 = vmatprep.subr.bf16.mxu0 %v571
          %708 = vmatpush1.bf16.msra.mxu0 %v570
          %709 = vmatprep.subr.bf16.mxu0 %v573
          %710 = vmatpush1.bf16.msra.mxu0 %v572
          %711 = vmatprep.subr.bf16.mxu0 %v575
          %712 = vmatpush1.bf16.msra.mxu0 %v574
          %713 = vmatprep.subr.bf16.mxu0 %v577
          %714 = vmatpush1.bf16.msra.mxu0 %v576
          %715 = vmatprep.subr.bf16.mxu0 %v579
          %716 = vmatpush1.bf16.msra.mxu0 %v578
          %717 = vmatprep.subr.bf16.mxu0 %v581
          %718 = vmatpush1.bf16.msra.mxu0 %v580
          %719 = vmatprep.subr.bf16.mxu0 %v583
          %720 = vmatpush1.bf16.msra.mxu0 %v582
          %721 = vmatprep.subr.bf16.mxu0 %v585
          %722 = vmatpush1.bf16.msra.mxu0 %v584
          %723 = vmatprep.subr.bf16.mxu0 %v587
          %724 = vmatpush1.bf16.msra.mxu0 %v586
          %725 = vmatprep.subr.bf16.mxu0 %v589
          %726 = vmatpush1.bf16.msra.mxu0 %v588
          %727 = vmatprep.mubr.bf16.mxu0 %v333
          %728 = vmatmul.mubr.bf16.gmra.mrb[0].mxu0 %v332
          %v729 = vpop.f32.mrb[0].mxu0
          %v730 = vadd.f32 %v689, %v729
          %v731 = vpop.f32.mrb[0].mxu0
          %v732 = vadd.f32 %v691, %v731
          %v733 = vpop.f32.mrb[0].mxu0
          %v734 = vpop.f32.mrb[0].mxu0
          %735 = vdwg.mxu0
          %v736 = vadd.f32 %v328, %v730
          %v737 = vadd.f32 %v329, %v732
          %738 = vst [vmem:[#allocation7] sm:$0xff] %v736
          %739 = vst [vmem:[#allocation7 + $0x8] sm:$0xff] %v737
        $region44: #{tpu_custom_call.1} parent=27 // pred_fallthru
          _
        %p740 = scmp.eq.s32.totalorder %s27, 1
        // Predicated region
        $region45: #{tpu_custom_call.1} parent=27 // pred_check
          %p741 = pneg %p740
        $region46: #{tpu_custom_call.1} parent=27 // pred_check_branch
          %743 = sbr.rel (%p741) target = $region48
        $region47: #{tpu_custom_call.1} parent=27 // pred_region
          %s744 = smul.u32 %s27, 512
          %v745 = vlaneseq
          %v746 = vand.u32 %v745, 127
          %v747 = vadd.s32 %v746, 128
          %v748 = vadd.s32 %v746, 256
          %v749 = vadd.s32 %v746, 384
          %v750 = vstv %s744
          %v751 = vadd.s32 %v750, %v746
          %v752 = vadd.s32 %v750, %v747
          %v753 = vadd.s32 %v750, %v748
          %v754 = vadd.s32 %v750, %v749
          %v755 = vlaneseq
          %v756 = vshrl.u32 %v755, 7
          %v757 = vadd.s32 %v756, 8
          %v758 = vadd.s32 %v756, 16
          %v759 = vadd.s32 %v756, 24
          %v760 = vadd.s32 %v756, 32
          %v761 = vadd.s32 %v756, 40
          %v762 = vadd.s32 %v756, 48
          %v763 = vadd.s32 %v756, 56
          %v764 = vadd.s32 %v756, 64
          %v765 = vadd.s32 %v756, 72
          %v766 = vadd.s32 %v756, 80
          %v767 = vadd.s32 %v756, 88
          %v768 = vadd.s32 %v756, 96
          %v769 = vadd.s32 %v756, 104
          %v770 = vadd.s32 %v756, 112
          %v771 = vadd.s32 %v756, 120
          %v772 = vadd.s32 %v756, 128
          %v773 = vadd.s32 %v756, 136
          %v774 = vadd.s32 %v756, 144
          %v775 = vadd.s32 %v756, 152
          %v776 = vadd.s32 %v756, 160
          %v777 = vadd.s32 %v756, 168
          %v778 = vadd.s32 %v756, 176
          %v779 = vadd.s32 %v756, 184
          %v780 = vadd.s32 %v756, 192
          %v781 = vadd.s32 %v756, 200
          %v782 = vadd.s32 %v756, 208
          %v783 = vadd.s32 %v756, 216
          %v784 = vadd.s32 %v756, 224
          %v785 = vadd.s32 %v756, 232
          %v786 = vadd.s32 %v756, 240
          %v787 = vadd.s32 %v756, 248
          %v788 = vadd.s32 %v756, 256
          %v789 = vadd.s32 %v756, 264
          %v790 = vadd.s32 %v756, 272
          %v791 = vadd.s32 %v756, 280
          %v792 = vadd.s32 %v756, 288
          %v793 = vadd.s32 %v756, 296
          %v794 = vadd.s32 %v756, 304
          %v795 = vadd.s32 %v756, 312
          %v796 = vadd.s32 %v756, 320
          %v797 = vadd.s32 %v756, 328
          %v798 = vadd.s32 %v756, 336
          %v799 = vadd.s32 %v756, 344
          %v800 = vadd.s32 %v756, 352
          %v801 = vadd.s32 %v756, 360
          %v802 = vadd.s32 %v756, 368
          %v803 = vadd.s32 %v756, 376
          %v804 = vadd.s32 %v756, 384
          %v805 = vadd.s32 %v756, 392
          %v806 = vadd.s32 %v756, 400
          %v807 = vadd.s32 %v756, 408
          %v808 = vadd.s32 %v756, 416
          %v809 = vadd.s32 %v756, 424
          %v810 = vadd.s32 %v756, 432
          %v811 = vadd.s32 %v756, 440
          %v812 = vadd.s32 %v756, 448
          %v813 = vadd.s32 %v756, 456
          %v814 = vadd.s32 %v756, 464
          %v815 = vadd.s32 %v756, 472
          %v816 = vadd.s32 %v756, 480
          %v817 = vadd.s32 %v756, 488
          %v818 = vadd.s32 %v756, 496
          %v819 = vadd.s32 %v756, 504
          %v820 = vadd.s32 %v750, %v756
          %v821 = vadd.s32 %v750, %v757
          %v822 = vadd.s32 %v750, %v758
          %v823 = vadd.s32 %v750, %v759
          %v824 = vadd.s32 %v750, %v760
          %v825 = vadd.s32 %v750, %v761
          %v826 = vadd.s32 %v750, %v762
          %v827 = vadd.s32 %v750, %v763
          %v828 = vadd.s32 %v750, %v764
          %v829 = vadd.s32 %v750, %v765
          %v830 = vadd.s32 %v750, %v766
          %v831 = vadd.s32 %v750, %v767
          %v832 = vadd.s32 %v750, %v768
          %v833 = vadd.s32 %v750, %v769
          %v834 = vadd.s32 %v750, %v770
          %v835 = vadd.s32 %v750, %v771
          %v836 = vadd.s32 %v750, %v772
          %v837 = vadd.s32 %v750, %v773
          %v838 = vadd.s32 %v750, %v774
          %v839 = vadd.s32 %v750, %v775
          %v840 = vadd.s32 %v750, %v776
          %v841 = vadd.s32 %v750, %v777
          %v842 = vadd.s32 %v750, %v778
          %v843 = vadd.s32 %v750, %v779
          %v844 = vadd.s32 %v750, %v780
          %v845 = vadd.s32 %v750, %v781
          %v846 = vadd.s32 %v750, %v782
          %v847 = vadd.s32 %v750, %v783
          %v848 = vadd.s32 %v750, %v784
          %v849 = vadd.s32 %v750, %v785
          %v850 = vadd.s32 %v750, %v786
          %v851 = vadd.s32 %v750, %v787
          %v852 = vadd.s32 %v750, %v788
          %v853 = vadd.s32 %v750, %v789
          %v854 = vadd.s32 %v750, %v790
          %v855 = vadd.s32 %v750, %v791
          %v856 = vadd.s32 %v750, %v792
          %v857 = vadd.s32 %v750, %v793
          %v858 = vadd.s32 %v750, %v794
          %v859 = vadd.s32 %v750, %v795
          %v860 = vadd.s32 %v750, %v796
          %v861 = vadd.s32 %v750, %v797
          %v862 = vadd.s32 %v750, %v798
          %v863 = vadd.s32 %v750, %v799
          %v864 = vadd.s32 %v750, %v800
          %v865 = vadd.s32 %v750, %v801
          %v866 = vadd.s32 %v750, %v802
          %v867 = vadd.s32 %v750, %v803
          %v868 = vadd.s32 %v750, %v804
          %v869 = vadd.s32 %v750, %v805
          %v870 = vadd.s32 %v750, %v806
          %v871 = vadd.s32 %v750, %v807
          %v872 = vadd.s32 %v750, %v808
          %v873 = vadd.s32 %v750, %v809
          %v874 = vadd.s32 %v750, %v810
          %v875 = vadd.s32 %v750, %v811
          %v876 = vadd.s32 %v750, %v812
          %v877 = vadd.s32 %v750, %v813
          %v878 = vadd.s32 %v750, %v814
          %v879 = vadd.s32 %v750, %v815
          %v880 = vadd.s32 %v750, %v816
          %v881 = vadd.s32 %v750, %v817
          %v882 = vadd.s32 %v750, %v818
          %v883 = vadd.s32 %v750, %v819
          %vm884 = vcmp.lt.s32.totalorder %v751, 600
          %vm885 = vcmp.lt.s32.totalorder %v752, 600
          %vm886 = vcmp.lt.s32.totalorder %v753, 600
          %vm887 = vcmp.lt.s32.totalorder %v754, 600
          %v888 = vld [vmem:[%s206] sm:$0xff]
          %v889 = vld [vmem:[%s206 + $0x8] sm:$0xff]
          %v890 = vld [vmem:[%s206 + $0x10] sm:$0xff]
          %v891 = vld [vmem:[%s206 + $0x18] sm:$0xff]
          %v892 = vsel %vm884, 1, 0
          %v893 = vsel %vm885, 1, 0
          %v894 = vsel %vm886, 1, 0
          %v895 = vsel %vm887, 1, 0
          %vm896 = vcmp.eq.s32.totalorder %v892, 1
          %vm897 = vcmp.eq.s32.totalorder %v893, 1
          %vm898 = vcmp.eq.s32.totalorder %v894, 1
          %vm899 = vcmp.eq.s32.totalorder %v895, 1
          %v900 = vsel %vm896, %v888, 0.0
          %v901 = vsel %vm897, %v889, 0.0
          %v902 = vsel %vm898, %v890, 0.0
          %v903 = vsel %vm899, %v891, 0.0
          %vm904 = vcmp.lt.s32.totalorder %v820, 600
          %vm905 = vcmp.lt.s32.totalorder %v821, 600
          %vm906 = vcmp.lt.s32.totalorder %v822, 600
          %vm907 = vcmp.lt.s32.totalorder %v823, 600
          %vm908 = vcmp.lt.s32.totalorder %v824, 600
          %vm909 = vcmp.lt.s32.totalorder %v825, 600
          %vm910 = vcmp.lt.s32.totalorder %v826, 600
          %vm911 = vcmp.lt.s32.totalorder %v827, 600
          %vm912 = vcmp.lt.s32.totalorder %v828, 600
          %vm913 = vcmp.lt.s32.totalorder %v829, 600
          %vm914 = vcmp.lt.s32.totalorder %v830, 600
          %vm915 = vcmp.lt.s32.totalorder %v831, 600
          %vm916 = vcmp.lt.s32.totalorder %v832, 600
          %vm917 = vcmp.lt.s32.totalorder %v833, 600
          %vm918 = vcmp.lt.s32.totalorder %v834, 600
          %vm919 = vcmp.lt.s32.totalorder %v835, 600
          %vm920 = vcmp.lt.s32.totalorder %v836, 600
          %vm921 = vcmp.lt.s32.totalorder %v837, 600
          %vm922 = vcmp.lt.s32.totalorder %v838, 600
          %vm923 = vcmp.lt.s32.totalorder %v839, 600
          %vm924 = vcmp.lt.s32.totalorder %v840, 600
          %vm925 = vcmp.lt.s32.totalorder %v841, 600
          %vm926 = vcmp.lt.s32.totalorder %v842, 600
          %vm927 = vcmp.lt.s32.totalorder %v843, 600
          %vm928 = vcmp.lt.s32.totalorder %v844, 600
          %vm929 = vcmp.lt.s32.totalorder %v845, 600
          %vm930 = vcmp.lt.s32.totalorder %v846, 600
          %vm931 = vcmp.lt.s32.totalorder %v847, 600
          %vm932 = vcmp.lt.s32.totalorder %v848, 600
          %vm933 = vcmp.lt.s32.totalorder %v849, 600
          %vm934 = vcmp.lt.s32.totalorder %v850, 600
          %vm935 = vcmp.lt.s32.totalorder %v851, 600
          %vm936 = vcmp.lt.s32.totalorder %v852, 600
          %vm937 = vcmp.lt.s32.totalorder %v853, 600
          %vm938 = vcmp.lt.s32.totalorder %v854, 600
          %vm939 = vcmp.lt.s32.totalorder %v855, 600
          %vm940 = vcmp.lt.s32.totalorder %v856, 600
          %vm941 = vcmp.lt.s32.totalorder %v857, 600
          %vm942 = vcmp.lt.s32.totalorder %v858, 600
          %vm943 = vcmp.lt.s32.totalorder %v859, 600
          %vm944 = vcmp.lt.s32.totalorder %v860, 600
          %vm945 = vcmp.lt.s32.totalorder %v861, 600
          %vm946 = vcmp.lt.s32.totalorder %v862, 600
          %vm947 = vcmp.lt.s32.totalorder %v863, 600
          %vm948 = vcmp.lt.s32.totalorder %v864, 600
          %vm949 = vcmp.lt.s32.totalorder %v865, 600
          %vm950 = vcmp.lt.s32.totalorder %v866, 600
          %vm951 = vcmp.lt.s32.totalorder %v867, 600
          %vm952 = vcmp.lt.s32.totalorder %v868, 600
          %vm953 = vcmp.lt.s32.totalorder %v869, 600
          %vm954 = vcmp.lt.s32.totalorder %v870, 600
          %vm955 = vcmp.lt.s32.totalorder %v871, 600
          %vm956 = vcmp.lt.s32.totalorder %v872, 600
          %vm957 = vcmp.lt.s32.totalorder %v873, 600
          %vm958 = vcmp.lt.s32.totalorder %v874, 600
          %vm959 = vcmp.lt.s32.totalorder %v875, 600
          %vm960 = vcmp.lt.s32.totalorder %v876, 600
          %vm961 = vcmp.lt.s32.totalorder %v877, 600
          %vm962 = vcmp.lt.s32.totalorder %v878, 600
          %vm963 = vcmp.lt.s32.totalorder %v879, 600
          %vm964 = vcmp.lt.s32.totalorder %v880, 600
          %vm965 = vcmp.lt.s32.totalorder %v881, 600
          %vm966 = vcmp.lt.s32.totalorder %v882, 600
          %vm967 = vcmp.lt.s32.totalorder %v883, 600
          %v968 = vld [vmem:[%s215] sm:$0xff]
          %v969 = vld [vmem:[%s215 + $0x8] sm:$0xff]
          %v970 = vld [vmem:[%s215 + $0x10] sm:$0xff]
          %v971 = vld [vmem:[%s215 + $0x18] sm:$0xff]
          %v972 = vld [vmem:[%s215 + $0x20] sm:$0xff]
          %v973 = vld [vmem:[%s215 + $0x28] sm:$0xff]
          %v974 = vld [vmem:[%s215 + $0x30] sm:$0xff]
          %v975 = vld [vmem:[%s215 + $0x38] sm:$0xff]
          %v976 = vld [vmem:[%s215 + $0x40] sm:$0xff]
          %v977 = vld [vmem:[%s215 + $0x48] sm:$0xff]
          %v978 = vld [vmem:[%s215 + $0x50] sm:$0xff]
          %v979 = vld [vmem:[%s215 + $0x58] sm:$0xff]
          %v980 = vld [vmem:[%s215 + $0x60] sm:$0xff]
          %v981 = vld [vmem:[%s215 + $0x68] sm:$0xff]
          %v982 = vld [vmem:[%s215 + $0x70] sm:$0xff]
          %v983 = vld [vmem:[%s215 + $0x78] sm:$0xff]
          %v984 = vld [vmem:[%s215 + $0x80] sm:$0xff]
          %v985 = vld [vmem:[%s215 + $0x88] sm:$0xff]
          %v986 = vld [vmem:[%s215 + $0x90] sm:$0xff]
          %v987 = vld [vmem:[%s215 + $0x98] sm:$0xff]
          %v988 = vld [vmem:[%s215 + $0xa0] sm:$0xff]
          %v989 = vld [vmem:[%s215 + $0xa8] sm:$0xff]
          %v990 = vld [vmem:[%s215 + $0xb0] sm:$0xff]
          %v991 = vld [vmem:[%s215 + $0xb8] sm:$0xff]
          %v992 = vld [vmem:[%s215 + $0xc0] sm:$0xff]
          %v993 = vld [vmem:[%s215 + $0xc8] sm:$0xff]
          %v994 = vld [vmem:[%s215 + $0xd0] sm:$0xff]
          %v995 = vld [vmem:[%s215 + $0xd8] sm:$0xff]
          %v996 = vld [vmem:[%s215 + $0xe0] sm:$0xff]
          %v997 = vld [vmem:[%s215 + $0xe8] sm:$0xff]
          %v998 = vld [vmem:[%s215 + $0xf0] sm:$0xff]
          %v999 = vld [vmem:[%s215 + $0xf8] sm:$0xff]
          %v1000 = vld [vmem:[%s215 + $0x100] sm:$0xff]
          %v1001 = vld [vmem:[%s215 + $0x108] sm:$0xff]
          %v1002 = vld [vmem:[%s215 + $0x110] sm:$0xff]
          %v1003 = vld [vmem:[%s215 + $0x118] sm:$0xff]
          %v1004 = vld [vmem:[%s215 + $0x120] sm:$0xff]
          %v1005 = vld [vmem:[%s215 + $0x128] sm:$0xff]
          %v1006 = vld [vmem:[%s215 + $0x130] sm:$0xff]
          %v1007 = vld [vmem:[%s215 + $0x138] sm:$0xff]
          %v1008 = vld [vmem:[%s215 + $0x140] sm:$0xff]
          %v1009 = vld [vmem:[%s215 + $0x148] sm:$0xff]
          %v1010 = vld [vmem:[%s215 + $0x150] sm:$0xff]
          %v1011 = vld [vmem:[%s215 + $0x158] sm:$0xff]
          %v1012 = vld [vmem:[%s215 + $0x160] sm:$0xff]
          %v1013 = vld [vmem:[%s215 + $0x168] sm:$0xff]
          %v1014 = vld [vmem:[%s215 + $0x170] sm:$0xff]
          %v1015 = vld [vmem:[%s215 + $0x178] sm:$0xff]
          %v1016 = vld [vmem:[%s215 + $0x180] sm:$0xff]
          %v1017 = vld [vmem:[%s215 + $0x188] sm:$0xff]
          %v1018 = vld [vmem:[%s215 + $0x190] sm:$0xff]
          %v1019 = vld [vmem:[%s215 + $0x198] sm:$0xff]
          %v1020 = vld [vmem:[%s215 + $0x1a0] sm:$0xff]
          %v1021 = vld [vmem:[%s215 + $0x1a8] sm:$0xff]
          %v1022 = vld [vmem:[%s215 + $0x1b0] sm:$0xff]
          %v1023 = vld [vmem:[%s215 + $0x1b8] sm:$0xff]
          %v1024 = vld [vmem:[%s215 + $0x1c0] sm:$0xff]
          %v1025 = vld [vmem:[%s215 + $0x1c8] sm:$0xff]
          %v1026 = vld [vmem:[%s215 + $0x1d0] sm:$0xff]
          %v1027 = vld [vmem:[%s215 + $0x1d8] sm:$0xff]
          %v1028 = vld [vmem:[%s215 + $0x1e0] sm:$0xff]
          %v1029 = vld [vmem:[%s215 + $0x1e8] sm:$0xff]
          %v1030 = vld [vmem:[%s215 + $0x1f0] sm:$0xff]
          %v1031 = vld [vmem:[%s215 + $0x1f8] sm:$0xff]
          %v1032 = vsel %vm904, 1, 0
          %v1033 = vsel %vm905, 1, 0
          %v1034 = vsel %vm906, 1, 0
          %v1035 = vsel %vm907, 1, 0
          %v1036 = vsel %vm908, 1, 0
          %v1037 = vsel %vm909, 1, 0
          %v1038 = vsel %vm910, 1, 0
          %v1039 = vsel %vm911, 1, 0
          %v1040 = vsel %vm912, 1, 0
          %v1041 = vsel %vm913, 1, 0
          %v1042 = vsel %vm914, 1, 0
          %v1043 = vsel %vm915, 1, 0
          %v1044 = vsel %vm916, 1, 0
          %v1045 = vsel %vm917, 1, 0
          %v1046 = vsel %vm918, 1, 0
          %v1047 = vsel %vm919, 1, 0
          %v1048 = vsel %vm920, 1, 0
          %v1049 = vsel %vm921, 1, 0
          %v1050 = vsel %vm922, 1, 0
          %v1051 = vsel %vm923, 1, 0
          %v1052 = vsel %vm924, 1, 0
          %v1053 = vsel %vm925, 1, 0
          %v1054 = vsel %vm926, 1, 0
          %v1055 = vsel %vm927, 1, 0
          %v1056 = vsel %vm928, 1, 0
          %v1057 = vsel %vm929, 1, 0
          %v1058 = vsel %vm930, 1, 0
          %v1059 = vsel %vm931, 1, 0
          %v1060 = vsel %vm932, 1, 0
          %v1061 = vsel %vm933, 1, 0
          %v1062 = vsel %vm934, 1, 0
          %v1063 = vsel %vm935, 1, 0
          %v1064 = vsel %vm936, 1, 0
          %v1065 = vsel %vm937, 1, 0
          %v1066 = vsel %vm938, 1, 0
          %v1067 = vsel %vm939, 1, 0
          %v1068 = vsel %vm940, 1, 0
          %v1069 = vsel %vm941, 1, 0
          %v1070 = vsel %vm942, 1, 0
          %v1071 = vsel %vm943, 1, 0
          %v1072 = vsel %vm944, 1, 0
          %v1073 = vsel %vm945, 1, 0
          %v1074 = vsel %vm946, 1, 0
          %v1075 = vsel %vm947, 1, 0
          %v1076 = vsel %vm948, 1, 0
          %v1077 = vsel %vm949, 1, 0
          %v1078 = vsel %vm950, 1, 0
          %v1079 = vsel %vm951, 1, 0
          %v1080 = vsel %vm952, 1, 0
          %v1081 = vsel %vm953, 1, 0
          %v1082 = vsel %vm954, 1, 0
          %v1083 = vsel %vm955, 1, 0
          %v1084 = vsel %vm956, 1, 0
          %v1085 = vsel %vm957, 1, 0
          %v1086 = vsel %vm958, 1, 0
          %v1087 = vsel %vm959, 1, 0
          %v1088 = vsel %vm960, 1, 0
          %v1089 = vsel %vm961, 1, 0
          %v1090 = vsel %vm962, 1, 0
          %v1091 = vsel %vm963, 1, 0
          %v1092 = vsel %vm964, 1, 0
          %v1093 = vsel %vm965, 1, 0
          %v1094 = vsel %vm966, 1, 0
          %v1095 = vsel %vm967, 1, 0
          %vm1096 = vcmp.eq.s32.totalorder %v1032, 1
          %vm1097 = vcmp.eq.s32.totalorder %v1033, 1
          %vm1098 = vcmp.eq.s32.totalorder %v1034, 1
          %vm1099 = vcmp.eq.s32.totalorder %v1035, 1
          %vm1100 = vcmp.eq.s32.totalorder %v1036, 1
          %vm1101 = vcmp.eq.s32.totalorder %v1037, 1
          %vm1102 = vcmp.eq.s32.totalorder %v1038, 1
          %vm1103 = vcmp.eq.s32.totalorder %v1039, 1
          %vm1104 = vcmp.eq.s32.totalorder %v1040, 1
          %vm1105 = vcmp.eq.s32.totalorder %v1041, 1
          %vm1106 = vcmp.eq.s32.totalorder %v1042, 1
          %vm1107 = vcmp.eq.s32.totalorder %v1043, 1
          %vm1108 = vcmp.eq.s32.totalorder %v1044, 1
          %vm1109 = vcmp.eq.s32.totalorder %v1045, 1
          %vm1110 = vcmp.eq.s32.totalorder %v1046, 1
          %vm1111 = vcmp.eq.s32.totalorder %v1047, 1
          %vm1112 = vcmp.eq.s32.totalorder %v1048, 1
          %vm1113 = vcmp.eq.s32.totalorder %v1049, 1
          %vm1114 = vcmp.eq.s32.totalorder %v1050, 1
          %vm1115 = vcmp.eq.s32.totalorder %v1051, 1
          %vm1116 = vcmp.eq.s32.totalorder %v1052, 1
          %vm1117 = vcmp.eq.s32.totalorder %v1053, 1
          %vm1118 = vcmp.eq.s32.totalorder %v1054, 1
          %vm1119 = vcmp.eq.s32.totalorder %v1055, 1
          %vm1120 = vcmp.eq.s32.totalorder %v1056, 1
          %vm1121 = vcmp.eq.s32.totalorder %v1057, 1
          %vm1122 = vcmp.eq.s32.totalorder %v1058, 1
          %vm1123 = vcmp.eq.s32.totalorder %v1059, 1
          %vm1124 = vcmp.eq.s32.totalorder %v1060, 1
          %vm1125 = vcmp.eq.s32.totalorder %v1061, 1
          %vm1126 = vcmp.eq.s32.totalorder %v1062, 1
          %vm1127 = vcmp.eq.s32.totalorder %v1063, 1
          %vm1128 = vcmp.eq.s32.totalorder %v1064, 1
          %vm1129 = vcmp.eq.s32.totalorder %v1065, 1
          %vm1130 = vcmp.eq.s32.totalorder %v1066, 1
          %vm1131 = vcmp.eq.s32.totalorder %v1067, 1
          %vm1132 = vcmp.eq.s32.totalorder %v1068, 1
          %vm1133 = vcmp.eq.s32.totalorder %v1069, 1
          %vm1134 = vcmp.eq.s32.totalorder %v1070, 1
          %vm1135 = vcmp.eq.s32.totalorder %v1071, 1
          %vm1136 = vcmp.eq.s32.totalorder %v1072, 1
          %vm1137 = vcmp.eq.s32.totalorder %v1073, 1
          %vm1138 = vcmp.eq.s32.totalorder %v1074, 1
          %vm1139 = vcmp.eq.s32.totalorder %v1075, 1
          %vm1140 = vcmp.eq.s32.totalorder %v1076, 1
          %vm1141 = vcmp.eq.s32.totalorder %v1077, 1
          %vm1142 = vcmp.eq.s32.totalorder %v1078, 1
          %vm1143 = vcmp.eq.s32.totalorder %v1079, 1
          %vm1144 = vcmp.eq.s32.totalorder %v1080, 1
          %vm1145 = vcmp.eq.s32.totalorder %v1081, 1
          %vm1146 = vcmp.eq.s32.totalorder %v1082, 1
          %vm1147 = vcmp.eq.s32.totalorder %v1083, 1
          %vm1148 = vcmp.eq.s32.totalorder %v1084, 1
          %vm1149 = vcmp.eq.s32.totalorder %v1085, 1
          %vm1150 = vcmp.eq.s32.totalorder %v1086, 1
          %vm1151 = vcmp.eq.s32.totalorder %v1087, 1
          %vm1152 = vcmp.eq.s32.totalorder %v1088, 1
          %vm1153 = vcmp.eq.s32.totalorder %v1089, 1
          %vm1154 = vcmp.eq.s32.totalorder %v1090, 1
          %vm1155 = vcmp.eq.s32.totalorder %v1091, 1
          %vm1156 = vcmp.eq.s32.totalorder %v1092, 1
          %vm1157 = vcmp.eq.s32.totalorder %v1093, 1
          %vm1158 = vcmp.eq.s32.totalorder %v1094, 1
          %vm1159 = vcmp.eq.s32.totalorder %v1095, 1
          %vm1160 = vmpackc.low %vm1096, %vm1096
          %vm1161 = vmpackc.low %vm1097, %vm1097
          %vm1162 = vmpackc.low %vm1098, %vm1098
          %vm1163 = vmpackc.low %vm1099, %vm1099
          %vm1164 = vmpackc.low %vm1100, %vm1100
          %vm1165 = vmpackc.low %vm1101, %vm1101
          %vm1166 = vmpackc.low %vm1102, %vm1102
          %vm1167 = vmpackc.low %vm1103, %vm1103
          %vm1168 = vmpackc.low %vm1104, %vm1104
          %vm1169 = vmpackc.low %vm1105, %vm1105
          %vm1170 = vmpackc.low %vm1106, %vm1106
          %vm1171 = vmpackc.low %vm1107, %vm1107
          %vm1172 = vmpackc.low %vm1108, %vm1108
          %vm1173 = vmpackc.low %vm1109, %vm1109
          %vm1174 = vmpackc.low %vm1110, %vm1110
          %vm1175 = vmpackc.low %vm1111, %vm1111
          %vm1176 = vmpackc.low %vm1112, %vm1112
          %vm1177 = vmpackc.low %vm1113, %vm1113
          %vm1178 = vmpackc.low %vm1114, %vm1114
          %vm1179 = vmpackc.low %vm1115, %vm1115
          %vm1180 = vmpackc.low %vm1116, %vm1116
          %vm1181 = vmpackc.low %vm1117, %vm1117
          %vm1182 = vmpackc.low %vm1118, %vm1118
          %vm1183 = vmpackc.low %vm1119, %vm1119
          %vm1184 = vmpackc.low %vm1120, %vm1120
          %vm1185 = vmpackc.low %vm1121, %vm1121
          %vm1186 = vmpackc.low %vm1122, %vm1122
          %vm1187 = vmpackc.low %vm1123, %vm1123
          %vm1188 = vmpackc.low %vm1124, %vm1124
          %vm1189 = vmpackc.low %vm1125, %vm1125
          %vm1190 = vmpackc.low %vm1126, %vm1126
          %vm1191 = vmpackc.low %vm1127, %vm1127
          %vm1192 = vmpackc.low %vm1128, %vm1128
          %vm1193 = vmpackc.low %vm1129, %vm1129
          %vm1194 = vmpackc.low %vm1130, %vm1130
          %vm1195 = vmpackc.low %vm1131, %vm1131
          %vm1196 = vmpackc.low %vm1132, %vm1132
          %vm1197 = vmpackc.low %vm1133, %vm1133
          %vm1198 = vmpackc.low %vm1134, %vm1134
          %vm1199 = vmpackc.low %vm1135, %vm1135
          %vm1200 = vmpackc.low %vm1136, %vm1136
          %vm1201 = vmpackc.low %vm1137, %vm1137
          %vm1202 = vmpackc.low %vm1138, %vm1138
          %vm1203 = vmpackc.low %vm1139, %vm1139
          %vm1204 = vmpackc.low %vm1140, %vm1140
          %vm1205 = vmpackc.low %vm1141, %vm1141
          %vm1206 = vmpackc.low %vm1142, %vm1142
          %vm1207 = vmpackc.low %vm1143, %vm1143
          %vm1208 = vmpackc.low %vm1144, %vm1144
          %vm1209 = vmpackc.low %vm1145, %vm1145
          %vm1210 = vmpackc.low %vm1146, %vm1146
          %vm1211 = vmpackc.low %vm1147, %vm1147
          %vm1212 = vmpackc.low %vm1148, %vm1148
          %vm1213 = vmpackc.low %vm1149, %vm1149
          %vm1214 = vmpackc.low %vm1150, %vm1150
          %vm1215 = vmpackc.low %vm1151, %vm1151
          %vm1216 = vmpackc.low %vm1152, %vm1152
          %vm1217 = vmpackc.low %vm1153, %vm1153
          %vm1218 = vmpackc.low %vm1154, %vm1154
          %vm1219 = vmpackc.low %vm1155, %vm1155
          %vm1220 = vmpackc.low %vm1156, %vm1156
          %vm1221 = vmpackc.low %vm1157, %vm1157
          %vm1222 = vmpackc.low %vm1158, %vm1158
          %vm1223 = vmpackc.low %vm1159, %vm1159
          %v1224 = vsel %vm1160, %v968, 0
          %v1225 = vsel %vm1161, %v969, 0
          %v1226 = vsel %vm1162, %v970, 0
          %v1227 = vsel %vm1163, %v971, 0
          %v1228 = vsel %vm1164, %v972, 0
          %v1229 = vsel %vm1165, %v973, 0
          %v1230 = vsel %vm1166, %v974, 0
          %v1231 = vsel %vm1167, %v975, 0
          %v1232 = vsel %vm1168, %v976, 0
          %v1233 = vsel %vm1169, %v977, 0
          %v1234 = vsel %vm1170, %v978, 0
          %v1235 = vsel %vm1171, %v979, 0
          %v1236 = vsel %vm1172, %v980, 0
          %v1237 = vsel %vm1173, %v981, 0
          %v1238 = vsel %vm1174, %v982, 0
          %v1239 = vsel %vm1175, %v983, 0
          %v1240 = vsel %vm1176, %v984, 0
          %v1241 = vsel %vm1177, %v985, 0
          %v1242 = vsel %vm1178, %v986, 0
          %v1243 = vsel %vm1179, %v987, 0
          %v1244 = vsel %vm1180, %v988, 0
          %v1245 = vsel %vm1181, %v989, 0
          %v1246 = vsel %vm1182, %v990, 0
          %v1247 = vsel %vm1183, %v991, 0
          %v1248 = vsel %vm1184, %v992, 0
          %v1249 = vsel %vm1185, %v993, 0
          %v1250 = vsel %vm1186, %v994, 0
          %v1251 = vsel %vm1187, %v995, 0
          %v1252 = vsel %vm1188, %v996, 0
          %v1253 = vsel %vm1189, %v997, 0
          %v1254 = vsel %vm1190, %v998, 0
          %v1255 = vsel %vm1191, %v999, 0
          %v1256 = vsel %vm1192, %v1000, 0
          %v1257 = vsel %vm1193, %v1001, 0
          %v1258 = vsel %vm1194, %v1002, 0
          %v1259 = vsel %vm1195, %v1003, 0
          %v1260 = vsel %vm1196, %v1004, 0
          %v1261 = vsel %vm1197, %v1005, 0
          %v1262 = vsel %vm1198, %v1006, 0
          %v1263 = vsel %vm1199, %v1007, 0
          %v1264 = vsel %vm1200, %v1008, 0
          %v1265 = vsel %vm1201, %v1009, 0
          %v1266 = vsel %vm1202, %v1010, 0
          %v1267 = vsel %vm1203, %v1011, 0
          %v1268 = vsel %vm1204, %v1012, 0
          %v1269 = vsel %vm1205, %v1013, 0
          %v1270 = vsel %vm1206, %v1014, 0
          %v1271 = vsel %vm1207, %v1015, 0
          %v1272 = vsel %vm1208, %v1016, 0
          %v1273 = vsel %vm1209, %v1017, 0
          %v1274 = vsel %vm1210, %v1018, 0
          %v1275 = vsel %vm1211, %v1019, 0
          %v1276 = vsel %vm1212, %v1020, 0
          %v1277 = vsel %vm1213, %v1021, 0
          %v1278 = vsel %vm1214, %v1022, 0
          %v1279 = vsel %vm1215, %v1023, 0
          %v1280 = vsel %vm1216, %v1024, 0
          %v1281 = vsel %vm1217, %v1025, 0
          %v1282 = vsel %vm1218, %v1026, 0
          %v1283 = vsel %vm1219, %v1027, 0
          %v1284 = vsel %vm1220, %v1028, 0
          %v1285 = vsel %vm1221, %v1029, 0
          %v1286 = vsel %vm1222, %v1030, 0
          %v1287 = vsel %vm1223, %v1031, 0
          %v1288 = vld [vmem:[#allocation7] sm:$0xff]
          %v1289 = vld [vmem:[#allocation7 + $0x8] sm:$0xff]
          %v1290 = vpack.c.bf16 %v900, %v900
          %v1291 = vpack.c.bf16 %v901, %v901
          %v1292 = vpack.c.bf16 %v902, %v902
          %v1293 = vpack.c.bf16 %v903, %v903
          %v1358 = vunpack.c.l.b16 %v1224
          %v1359 = vunpack.c.h.b16 %v1224
          %v1360 = vunpack.c.l.b16 %v1225
          %v1361 = vunpack.c.h.b16 %v1225
          %v1362 = vunpack.c.l.b16 %v1226
          %v1363 = vunpack.c.h.b16 %v1226
          %v1364 = vunpack.c.l.b16 %v1227
          %v1365 = vunpack.c.h.b16 %v1227
          %v1366 = vunpack.c.l.b16 %v1228
          %v1367 = vunpack.c.h.b16 %v1228
          %v1368 = vunpack.c.l.b16 %v1229
          %v1369 = vunpack.c.h.b16 %v1229
          %v1370 = vunpack.c.l.b16 %v1230
          %v1371 = vunpack.c.h.b16 %v1230
          %v1372 = vunpack.c.l.b16 %v1231
          %v1373 = vunpack.c.h.b16 %v1231
          %v1374 = vunpack.c.l.b16 %v1232
          %v1375 = vunpack.c.h.b16 %v1232
          %v1376 = vunpack.c.l.b16 %v1233
          %v1377 = vunpack.c.h.b16 %v1233
          %v1378 = vunpack.c.l.b16 %v1234
          %v1379 = vunpack.c.h.b16 %v1234
          %v1380 = vunpack.c.l.b16 %v1235
          %v1381 = vunpack.c.h.b16 %v1235
          %v1382 = vunpack.c.l.b16 %v1236
          %v1383 = vunpack.c.h.b16 %v1236
          %v1384 = vunpack.c.l.b16 %v1237
          %v1385 = vunpack.c.h.b16 %v1237
          %v1386 = vunpack.c.l.b16 %v1238
          %v1387 = vunpack.c.h.b16 %v1238
          %v1388 = vunpack.c.l.b16 %v1239
          %v1389 = vunpack.c.h.b16 %v1239
          %v1390 = vunpack.c.l.b16 %v1240
          %v1391 = vunpack.c.h.b16 %v1240
          %v1392 = vunpack.c.l.b16 %v1241
          %v1393 = vunpack.c.h.b16 %v1241
          %v1394 = vunpack.c.l.b16 %v1242
          %v1395 = vunpack.c.h.b16 %v1242
          %v1396 = vunpack.c.l.b16 %v1243
          %v1397 = vunpack.c.h.b16 %v1243
          %v1398 = vunpack.c.l.b16 %v1244
          %v1399 = vunpack.c.h.b16 %v1244
          %v1400 = vunpack.c.l.b16 %v1245
          %v1401 = vunpack.c.h.b16 %v1245
          %v1402 = vunpack.c.l.b16 %v1246
          %v1403 = vunpack.c.h.b16 %v1246
          %v1404 = vunpack.c.l.b16 %v1247
          %v1405 = vunpack.c.h.b16 %v1247
          %v1406 = vunpack.c.l.b16 %v1248
          %v1407 = vunpack.c.h.b16 %v1248
          %v1408 = vunpack.c.l.b16 %v1249
          %v1409 = vunpack.c.h.b16 %v1249
          %v1410 = vunpack.c.l.b16 %v1250
          %v1411 = vunpack.c.h.b16 %v1250
          %v1412 = vunpack.c.l.b16 %v1251
          %v1413 = vunpack.c.h.b16 %v1251
          %v1414 = vunpack.c.l.b16 %v1252
          %v1415 = vunpack.c.h.b16 %v1252
          %v1416 = vunpack.c.l.b16 %v1253
          %v1417 = vunpack.c.h.b16 %v1253
          %v1418 = vunpack.c.l.b16 %v1254
          %v1419 = vunpack.c.h.b16 %v1254
          %v1420 = vunpack.c.l.b16 %v1255
          %v1421 = vunpack.c.h.b16 %v1255
          %v1422 = vunpack.c.l.b16 %v1256
          %v1423 = vunpack.c.h.b16 %v1256
          %v1424 = vunpack.c.l.b16 %v1257
          %v1425 = vunpack.c.h.b16 %v1257
          %v1426 = vunpack.c.l.b16 %v1258
          %v1427 = vunpack.c.h.b16 %v1258
          %v1428 = vunpack.c.l.b16 %v1259
          %v1429 = vunpack.c.h.b16 %v1259
          %v1430 = vunpack.c.l.b16 %v1260
          %v1431 = vunpack.c.h.b16 %v1260
          %v1432 = vunpack.c.l.b16 %v1261
          %v1433 = vunpack.c.h.b16 %v1261
          %v1434 = vunpack.c.l.b16 %v1262
          %v1435 = vunpack.c.h.b16 %v1262
          %v1436 = vunpack.c.l.b16 %v1263
          %v1437 = vunpack.c.h.b16 %v1263
          %v1438 = vunpack.c.l.b16 %v1264
          %v1439 = vunpack.c.h.b16 %v1264
          %v1440 = vunpack.c.l.b16 %v1265
          %v1441 = vunpack.c.h.b16 %v1265
          %v1442 = vunpack.c.l.b16 %v1266
          %v1443 = vunpack.c.h.b16 %v1266
          %v1444 = vunpack.c.l.b16 %v1267
          %v1445 = vunpack.c.h.b16 %v1267
          %v1446 = vunpack.c.l.b16 %v1268
          %v1447 = vunpack.c.h.b16 %v1268
          %v1448 = vunpack.c.l.b16 %v1269
          %v1449 = vunpack.c.h.b16 %v1269
          %v1450 = vunpack.c.l.b16 %v1270
          %v1451 = vunpack.c.h.b16 %v1270
          %v1452 = vunpack.c.l.b16 %v1271
          %v1453 = vunpack.c.h.b16 %v1271
          %v1454 = vunpack.c.l.b16 %v1272
          %v1455 = vunpack.c.h.b16 %v1272
          %v1456 = vunpack.c.l.b16 %v1273
          %v1457 = vunpack.c.h.b16 %v1273
          %v1458 = vunpack.c.l.b16 %v1274
          %v1459 = vunpack.c.h.b16 %v1274
          %v1460 = vunpack.c.l.b16 %v1275
          %v1461 = vunpack.c.h.b16 %v1275
          %v1462 = vunpack.c.l.b16 %v1276
          %v1463 = vunpack.c.h.b16 %v1276
          %v1464 = vunpack.c.l.b16 %v1277
          %v1465 = vunpack.c.h.b16 %v1277
          %v1466 = vunpack.c.l.b16 %v1278
          %v1467 = vunpack.c.h.b16 %v1278
          %v1468 = vunpack.c.l.b16 %v1279
          %v1469 = vunpack.c.h.b16 %v1279
          %v1470 = vunpack.c.l.b16 %v1280
          %v1471 = vunpack.c.h.b16 %v1280
          %v1472 = vunpack.c.l.b16 %v1281
          %v1473 = vunpack.c.h.b16 %v1281
          %v1474 = vunpack.c.l.b16 %v1282
          %v1475 = vunpack.c.h.b16 %v1282
          %v1476 = vunpack.c.l.b16 %v1283
          %v1477 = vunpack.c.h.b16 %v1283
          %v1478 = vunpack.c.l.b16 %v1284
          %v1479 = vunpack.c.h.b16 %v1284
          %v1480 = vunpack.c.l.b16 %v1285
          %v1481 = vunpack.c.h.b16 %v1285
          %v1482 = vunpack.c.l.b16 %v1286
          %v1483 = vunpack.c.h.b16 %v1286
          %v1484 = vunpack.c.l.b16 %v1287
          %v1485 = vunpack.c.h.b16 %v1287
          %v1486 = vpack.c.b16 %v1360, %v1358
          %v1487 = vpack.c.b16 %v1361, %v1359
          %v1488 = vpack.c.b16 %v1364, %v1362
          %v1489 = vpack.c.b16 %v1365, %v1363
          %v1490 = vpack.c.b16 %v1368, %v1366
          %v1491 = vpack.c.b16 %v1369, %v1367
          %v1492 = vpack.c.b16 %v1372, %v1370
          %v1493 = vpack.c.b16 %v1373, %v1371
          %v1494 = vpack.c.b16 %v1376, %v1374
          %v1495 = vpack.c.b16 %v1377, %v1375
          %v1496 = vpack.c.b16 %v1380, %v1378
          %v1497 = vpack.c.b16 %v1381, %v1379
          %v1498 = vpack.c.b16 %v1384, %v1382
          %v1499 = vpack.c.b16 %v1385, %v1383
          %v1500 = vpack.c.b16 %v1388, %v1386
          %v1501 = vpack.c.b16 %v1389, %v1387
          %v1502 = vpack.c.b16 %v1392, %v1390
          %v1503 = vpack.c.b16 %v1393, %v1391
          %v1504 = vpack.c.b16 %v1396, %v1394
          %v1505 = vpack.c.b16 %v1397, %v1395
          %v1506 = vpack.c.b16 %v1400, %v1398
          %v1507 = vpack.c.b16 %v1401, %v1399
          %v1508 = vpack.c.b16 %v1404, %v1402
          %v1509 = vpack.c.b16 %v1405, %v1403
          %v1510 = vpack.c.b16 %v1408, %v1406
          %v1511 = vpack.c.b16 %v1409, %v1407
          %v1512 = vpack.c.b16 %v1412, %v1410
          %v1513 = vpack.c.b16 %v1413, %v1411
          %v1514 = vpack.c.b16 %v1416, %v1414
          %v1515 = vpack.c.b16 %v1417, %v1415
          %v1516 = vpack.c.b16 %v1420, %v1418
          %v1517 = vpack.c.b16 %v1421, %v1419
          %v1518 = vpack.c.b16 %v1424, %v1422
          %v1519 = vpack.c.b16 %v1425, %v1423
          %v1520 = vpack.c.b16 %v1428, %v1426
          %v1521 = vpack.c.b16 %v1429, %v1427
          %v1522 = vpack.c.b16 %v1432, %v1430
          %v1523 = vpack.c.b16 %v1433, %v1431
          %v1524 = vpack.c.b16 %v1436, %v1434
          %v1525 = vpack.c.b16 %v1437, %v1435
          %v1526 = vpack.c.b16 %v1440, %v1438
          %v1527 = vpack.c.b16 %v1441, %v1439
          %v1528 = vpack.c.b16 %v1444, %v1442
          %v1529 = vpack.c.b16 %v1445, %v1443
          %v1530 = vpack.c.b16 %v1448, %v1446
          %v1531 = vpack.c.b16 %v1449, %v1447
          %v1532 = vpack.c.b16 %v1452, %v1450
          %v1533 = vpack.c.b16 %v1453, %v1451
          %v1534 = vpack.c.b16 %v1456, %v1454
          %v1535 = vpack.c.b16 %v1457, %v1455
          %v1536 = vpack.c.b16 %v1460, %v1458
          %v1537 = vpack.c.b16 %v1461, %v1459
          %v1538 = vpack.c.b16 %v1464, %v1462
          %v1539 = vpack.c.b16 %v1465, %v1463
          %v1540 = vpack.c.b16 %v1468, %v1466
          %v1541 = vpack.c.b16 %v1469, %v1467
          %v1542 = vpack.c.b16 %v1472, %v1470
          %v1543 = vpack.c.b16 %v1473, %v1471
          %v1544 = vpack.c.b16 %v1476, %v1474
          %v1545 = vpack.c.b16 %v1477, %v1475
          %v1546 = vpack.c.b16 %v1480, %v1478
          %v1547 = vpack.c.b16 %v1481, %v1479
          %v1548 = vpack.c.b16 %v1484, %v1482
          %v1549 = vpack.c.b16 %v1485, %v1483
          %1614 = vmatprep.subr.bf16.mxu0 %v1487
          %1615 = vmatpush1.bf16.msra.mxu0 %v1486
          %1616 = vmatprep.subr.bf16.mxu0 %v1489
          %1617 = vmatpush1.bf16.msra.mxu0 %v1488
          %1618 = vmatprep.subr.bf16.mxu0 %v1491
          %1619 = vmatpush1.bf16.msra.mxu0 %v1490
          %1620 = vmatprep.subr.bf16.mxu0 %v1493
          %1621 = vmatpush1.bf16.msra.mxu0 %v1492
          %1622 = vmatprep.subr.bf16.mxu0 %v1495
          %1623 = vmatpush1.bf16.msra.mxu0 %v1494
          %1624 = vmatprep.subr.bf16.mxu0 %v1497
          %1625 = vmatpush1.bf16.msra.mxu0 %v1496
          %1626 = vmatprep.subr.bf16.mxu0 %v1499
          %1627 = vmatpush1.bf16.msra.mxu0 %v1498
          %1628 = vmatprep.subr.bf16.mxu0 %v1501
          %1629 = vmatpush1.bf16.msra.mxu0 %v1500
          %1630 = vmatprep.subr.bf16.mxu0 %v1503
          %1631 = vmatpush1.bf16.msra.mxu0 %v1502
          %1632 = vmatprep.subr.bf16.mxu0 %v1505
          %1633 = vmatpush1.bf16.msra.mxu0 %v1504
          %1634 = vmatprep.subr.bf16.mxu0 %v1507
          %1635 = vmatpush1.bf16.msra.mxu0 %v1506
          %1636 = vmatprep.subr.bf16.mxu0 %v1509
          %1637 = vmatpush1.bf16.msra.mxu0 %v1508
          %1638 = vmatprep.subr.bf16.mxu0 %v1511
          %1639 = vmatpush1.bf16.msra.mxu0 %v1510
          %1640 = vmatprep.subr.bf16.mxu0 %v1513
          %1641 = vmatpush1.bf16.msra.mxu0 %v1512
          %1642 = vmatprep.subr.bf16.mxu0 %v1515
          %1643 = vmatpush1.bf16.msra.mxu0 %v1514
          %1644 = vmatprep.subr.bf16.mxu0 %v1517
          %1645 = vmatpush1.bf16.msra.mxu0 %v1516
          %1646 = vmatprep.mubr.bf16.mxu0 %v1291
          %1647 = vmatmul.mubr.bf16.gmra.mrb[0].mxu0 %v1290
          %v1648 = vpop.f32.mrb[0].mxu0
          %v1649 = vadd.f32 0.0, %v1648
          %v1650 = vpop.f32.mrb[0].mxu0
          %v1651 = vadd.f32 0.0, %v1650
          %v1652 = vpop.f32.mrb[0].mxu0
          %v1653 = vpop.f32.mrb[0].mxu0
          %1654 = vdwg.mxu0
          %1655 = vmatprep.subr.bf16.mxu0 %v1519
          %1656 = vmatpush1.bf16.msra.mxu0 %v1518
          %1657 = vmatprep.subr.bf16.mxu0 %v1521
          %1658 = vmatpush1.bf16.msra.mxu0 %v1520
          %1659 = vmatprep.subr.bf16.mxu0 %v1523
          %1660 = vmatpush1.bf16.msra.mxu0 %v1522
          %1661 = vmatprep.subr.bf16.mxu0 %v1525
          %1662 = vmatpush1.bf16.msra.mxu0 %v1524
          %1663 = vmatprep.subr.bf16.mxu0 %v1527
          %1664 = vmatpush1.bf16.msra.mxu0 %v1526
          %1665 = vmatprep.subr.bf16.mxu0 %v1529
          %1666 = vmatpush1.bf16.msra.mxu0 %v1528
          %1667 = vmatprep.subr.bf16.mxu0 %v1531
          %1668 = vmatpush1.bf16.msra.mxu0 %v1530
          %1669 = vmatprep.subr.bf16.mxu0 %v1533
          %1670 = vmatpush1.bf16.msra.mxu0 %v1532
          %1671 = vmatprep.subr.bf16.mxu0 %v1535
          %1672 = vmatpush1.bf16.msra.mxu0 %v1534
          %1673 = vmatprep.subr.bf16.mxu0 %v1537
          %1674 = vmatpush1.bf16.msra.mxu0 %v1536
          %1675 = vmatprep.subr.bf16.mxu0 %v1539
          %1676 = vmatpush1.bf16.msra.mxu0 %v1538
          %1677 = vmatprep.subr.bf16.mxu0 %v1541
          %1678 = vmatpush1.bf16.msra.mxu0 %v1540
          %1679 = vmatprep.subr.bf16.mxu0 %v1543
          %1680 = vmatpush1.bf16.msra.mxu0 %v1542
          %1681 = vmatprep.subr.bf16.mxu0 %v1545
          %1682 = vmatpush1.bf16.msra.mxu0 %v1544
          %1683 = vmatprep.subr.bf16.mxu0 %v1547
          %1684 = vmatpush1.bf16.msra.mxu0 %v1546
          %1685 = vmatprep.subr.bf16.mxu0 %v1549
          %1686 = vmatpush1.bf16.msra.mxu0 %v1548
          %1687 = vmatprep.mubr.bf16.mxu0 %v1293
          %1688 = vmatmul.mubr.bf16.gmra.mrb[0].mxu0 %v1292
          %v1689 = vpop.f32.mrb[0].mxu0
          %v1690 = vadd.f32 %v1649, %v1689
          %v1691 = vpop.f32.mrb[0].mxu0
          %v1692 = vadd.f32 %v1651, %v1691
          %v1693 = vpop.f32.mrb[0].mxu0
          %v1694 = vpop.f32.mrb[0].mxu0
          %1695 = vdwg.mxu0
          %v1696 = vadd.f32 %v1288, %v1690
          %v1697 = vadd.f32 %v1289, %v1692
          %1698 = vst [vmem:[#allocation7] sm:$0xff] %v1696
          %1699 = vst [vmem:[#allocation7 + $0x8] sm:$0xff] %v1697
        $region48: #{tpu_custom_call.1} parent=27 // pred_fallthru
          _
        // Predicated region
        $region49: #{tpu_custom_call.1} parent=27 // pred_check
          %p1700 = pneg %p115
        $region50: #{tpu_custom_call.1} parent=27 // pred_check_branch
          %1702 = sbr.rel (%p1700) target = $region52
        $region51: #{tpu_custom_call.1} parent=27 // pred_region
          %s1703 = smul.u32 2, %s26
          %s1705 = ssub.s32 256, 256
          %1706 = vsyncadd [#allocation4], %s1705
          %s1707 = smul.addr %s25, 2
          %s1708 = sadd.s32 %s1703, %s1707
          %s1709 = smul.addr %s1708, 128
          %s1710 = scalar_lea.hbm %s2, %s1709
          %s1712 = sshll.u32 [#allocation7], 4
          %s1713 = int_to_ptr.vmem [resolvable:$true] %s1712
          %1715 = dma.vmem_to_hbm [thread:$0]  %s1713, 256, %s1710, [#allocation4]
        $region52: #{tpu_custom_call.1} parent=27 // pred_fallthru
          _
        // Predicated region
        $region53: #{tpu_custom_call.1} parent=27 // pred_check
          %p1716 = pneg %p115
        $region54: #{tpu_custom_call.1} parent=27 // pred_check_branch
          %1718 = sbr.rel (%p1716) target = $region56
        $region55: #{tpu_custom_call.1} parent=27 // pred_region
          %1719 = dma.done [#allocation4], 256
        $region56: #{tpu_custom_call.1} parent=27 // pred_fallthru
          _
      $region28: #{tpu_custom_call.1} parent=5 // pred_fallthru
        _
      %p1720 = scmp.le.s32.totalorder 2, %s15
      // Predicated region
      $region57: #{tpu_custom_call.1} parent=5 // pred_check
        %p1721 = pneg %p1720
      $region58: #{tpu_custom_call.1} parent=5 // pred_check_branch
        %1723 = sbr.rel (%p1721) target = $region60
      $region59: #{tpu_custom_call.1} parent=5 // pred_region
        %s1724 = ssub.s32 %s15, 2
      $region60: #{tpu_custom_call.1} parent=5 // pred_fallthru
        _
    $region6: #{tpu_custom_call.1} parent=1 // loop_footer
      %s19 = sadd.s32 1, %s15
    $region7: #{tpu_custom_call.1} parent=1 // loop_footer_branch
      %14 = sbr.rel target = $region3
    $region8: #{tpu_custom_call.1} parent=1 // loop_exit
      _
    %1725 = vsyncpa [#allocation3], 1
    %s1726 = scalar_lea.sflag [#allocation3], 1
    %1727 = vsyncpa %s1726, 1
    %1728 = vsyncpa [#allocation6], 1
    %s1729 = scalar_lea.sflag [#allocation6], 1
    %1730 = vsyncpa %s1729, 1
    %1731 = vsyncpa [#allocation4], 1
    %s1732 = scalar_lea.sflag [#allocation4], 1
    %1733 = vsyncpa %s1732, 1

</llo_original>
